<compile_context>
chip_gen: v7x
topology: tpu7x:2x2x1
jax: 0.10.0
libtpu: 0.0.40
codegen_flags: <defaults>
</compile_context>

<pallas_src>
import jax
import jax.numpy as jnp
from jax.experimental import pallas as pl
from jax.experimental.pallas import tpu as pltpu


D = 128          # hidden size (lane-dense: multiple of 128)
NCLS = 3         # real number of classes
NCLS_PAD = 128   # lane-dense padded classifier output width
TILE_B = 8       # batch-pairs per grid step (multiple of 8 sublanes)


# ----------------------------------------------------------------------------
# Fused kernel (one batch tile of TILE_B sentence pairs):
#   mean_k = sum_s( h_k * m_k )          masked mean, normalization prefolded
#   e_k    = mean_k @ W_pool + b_pool
#   logits = e1 @ W1 + e2 @ W2 + |e1-e2| @ W3 + b_cls   (padded to 128 lanes)
# ----------------------------------------------------------------------------
def fused_sbert_kernel(h1_ref, h2_ref, m1_ref, m2_ref,
                       wp_ref, bp_ref, w1_ref, w2_ref, w3_ref, bc_ref,
                       e1_ref, e2_ref, logits_ref):
    # Masked mean pooling: bf16 tokens are promoted to f32 by the f32
    # normalized mask; reduce over S is a sublane/XLU reduce (no MXU, no
    # quadratic pooling matrix).
    mean1 = (h1_ref[...] * m1_ref[...]).sum(axis=1)          # (TILE_B, D) f32
    mean2 = (h2_ref[...] * m2_ref[...]).sum(axis=1)          # (TILE_B, D) f32

    # Pooling Linear (weights grid-invariant, resident in VMEM).
    wp = wp_ref[...]
    bp = bp_ref[...]
    e1 = jnp.dot(mean1, wp, preferred_element_type=jnp.float32) + bp
    e2 = jnp.dot(mean2, wp, preferred_element_type=jnp.float32) + bp
    e1_ref[...] = e1
    e2_ref[...] = e2

    diff = jnp.abs(e1 - e2)

    # Classifier over [e1, e2, |e1-e2|] without a lane-axis concatenate.
    logits_ref[...] = (
        jnp.dot(e1, w1_ref[...], preferred_element_type=jnp.float32)
        + jnp.dot(e2, w2_ref[...], preferred_element_type=jnp.float32)
        + jnp.dot(diff, w3_ref[...], preferred_element_type=jnp.float32)
        + bc_ref[...]
    )                                                        # (TILE_B, NCLS_PAD)


def _pad_batch(x, b_pad):
    pad = b_pad - x.shape[0]
    if pad == 0:
        return x
    return jnp.pad(x, ((0, pad),) + ((0, 0),) * (x.ndim - 1))


def sbert_heads_pallas(h1, h2, m1n, m2n, params):
    """h1/h2: (B, S, D) bf16 token embeddings; m1n/m2n: (B, S, 1) f32 normalized masks."""
    B, S, Dh = h1.shape
    n_tiles = pl.cdiv(B, TILE_B)
    b_pad = n_tiles * TILE_B

    h1p = _pad_batch(h1, b_pad)
    h2p = _pad_batch(h2, b_pad)
    m1p = _pad_batch(m1n, b_pad)
    m2p = _pad_batch(m2n, b_pad)

    tile_map3 = lambda i: (i, 0, 0)
    tile_map2 = lambda i: (i, 0)
    const_map = lambda i: (0, 0)

    e1_all, e2_all, logits_pad = pl.pallas_call(
        fused_sbert_kernel,
        out_shape=(
            jax.ShapeDtypeStruct((b_pad, Dh), jnp.float32),
            jax.ShapeDtypeStruct((b_pad, Dh), jnp.float32),
            jax.ShapeDtypeStruct((b_pad, NCLS_PAD), jnp.float32),
        ),
        grid=(n_tiles,),
        in_specs=[
            pl.BlockSpec((TILE_B, S, Dh), tile_map3),        # sentence-1 tokens (bf16)
            pl.BlockSpec((TILE_B, S, Dh), tile_map3),        # sentence-2 tokens (bf16)
            pl.BlockSpec((TILE_B, S, 1), tile_map3),         # normalized mask 1
            pl.BlockSpec((TILE_B, S, 1), tile_map3),         # normalized mask 2
            pl.BlockSpec((Dh, Dh), const_map),               # W_pool^T   (resident)
            pl.BlockSpec((1, Dh), const_map),                # b_pool     (resident)
            pl.BlockSpec((Dh, NCLS_PAD), const_map),         # W_cls slab 1
            pl.BlockSpec((Dh, NCLS_PAD), const_map),         # W_cls slab 2
            pl.BlockSpec((Dh, NCLS_PAD), const_map),         # W_cls slab 3
            pl.BlockSpec((1, NCLS_PAD), const_map),          # b_cls (padded)
        ],
        out_specs=(
            pl.BlockSpec((TILE_B, Dh), tile_map2),
            pl.BlockSpec((TILE_B, Dh), tile_map2),
            pl.BlockSpec((TILE_B, NCLS_PAD), tile_map2),
        ),
        compiler_params=pltpu.CompilerParams(
            dimension_semantics=("parallel",)),
    )(h1p, h2p, m1p, m2p,
      params["w_pool_t"], params["b_pool"],
      params["w_cls1_t"], params["w_cls2_t"], params["w_cls3_t"],
      params["b_cls_pad"])

    return e1_all[:B], e2_all[:B], logits_pad[:B, :NCLS]


# ----------------------------------------------------------------------------
# Plain-JAX preprocessing: fold the mask-sum clamp/divide (f32) into the mask
# itself so the in-kernel pooling is a single multiply-reduce.
#   m_norm[b, s] = mask[b, s] / clamp(sum_s mask[b, s], 1e-9)
# ----------------------------------------------------------------------------
def normalize_mask(mask):
    m = mask.astype(jnp.float32)
    m = m / jnp.maximum(jnp.sum(m, axis=1, keepdims=True), 1e-9)
    return m[:, :, None]                                     # (B, S, 1)


# ----------------------------------------------------------------------------
# SentenceBERT forward (sentence-pair classification path)
# ----------------------------------------------------------------------------
def sentence_bert_forward(params, input_ids_1, attention_mask_1,
                          input_ids_2, attention_mask_2):
    # "BERT" stand-in: deterministic embedding lookup (bf16 hidden states).
    hidden_1 = params["emb_table"][input_ids_1]              # (B, S, D) bf16
    hidden_2 = params["emb_table"][input_ids_2]              # (B, S, D) bf16

    m1n = normalize_mask(attention_mask_1)
    m2n = normalize_mask(attention_mask_2)

    e1, e2, logits = sbert_heads_pallas(hidden_1, hidden_2, m1n, m2n, params)
    # dropout is identity in eval mode
    return logits, e1, e2


def init_params(key, vocab=64, embedding_dim=D, n_cls=NCLS):
    k_emb, k_wp, k_bp, k_wc, k_bc = jax.random.split(key, 5)
    # PyTorch Linear stores (out, in); we store transposed (in, out) for the MXU.
    w_cls_t = jax.random.normal(k_wc, (3 * embedding_dim, n_cls), jnp.float32) * 0.05
    b_cls = jax.random.normal(k_bc, (1, n_cls), jnp.float32) * 0.05
    # lane-dense (zero-)padded classifier slabs used by the kernel
    w_cls_pad = jnp.zeros((3 * embedding_dim, NCLS_PAD), jnp.float32).at[:, :n_cls].set(w_cls_t)
    b_cls_pad = jnp.zeros((1, NCLS_PAD), jnp.float32).at[:, :n_cls].set(b_cls)
    emb = jax.random.normal(k_emb, (vocab, embedding_dim), jnp.float32) * 0.02
    return {
        "emb_table": emb.astype(jnp.bfloat16),     # bf16: halves token-embedding HBM bytes
        "w_pool_t": jax.random.normal(k_wp, (embedding_dim, embedding_dim), jnp.float32) * 0.05,
        "b_pool": jax.random.normal(k_bp, (1, embedding_dim), jnp.float32) * 0.05,
        "w_cls_t": w_cls_t,       # unpadded, for the plain-JAX reference
        "b_cls": b_cls,
        "w_cls1_t": w_cls_pad[:embedding_dim],
        "w_cls2_t": w_cls_pad[embedding_dim:2 * embedding_dim],
        "w_cls3_t": w_cls_pad[2 * embedding_dim:],
        "b_cls_pad": b_cls_pad,
    }


if __name__ == "__main__":
    B, S, VOCAB = 12, 16, 64      # grid has 2 batch tiles (12 -> padded 16)
    key = jax.random.PRNGKey(0)
    k_params, k_id1, k_id2, k_l1, k_l2 = jax.random.split(key, 5)

    params = init_params(k_params, vocab=VOCAB, embedding_dim=D)

    input_ids_1 = jax.random.randint(k_id1, (B, S), 0, VOCAB, dtype=jnp.int32)
    input_ids_2 = jax.random.randint(k_id2, (B, S), 0, VOCAB, dtype=jnp.int32)
    # masks: per-row valid prefix, rest padding
    lens1 = jax.random.randint(k_l1, (B, 1), 1, S + 1, dtype=jnp.int32)
    lens2 = jax.random.randint(k_l2, (B, 1), 1, S + 1, dtype=jnp.int32)
    pos = jnp.arange(S)[None, :]
    attention_mask_1 = (pos < lens1).astype(jnp.int32)
    attention_mask_2 = (pos < lens2).astype(jnp.int32)

    forward = jax.jit(sentence_bert_forward)
    logits, e1, e2 = forward(params, input_ids_1, attention_mask_1,
                             input_ids_2, attention_mask_2)
    jax.block_until_ready((logits, e1, e2))

    # quick sanity check against a plain-JAX reference (same bf16 hidden states)
    def ref_encode(ids, mask):
        h = params["emb_table"][ids].astype(jnp.float32)
        m = mask.astype(jnp.float32)[:, :, None]
        mean = jnp.sum(h * m, axis=1) / jnp.maximum(jnp.sum(m, axis=1), 1e-9)
        return mean @ params["w_pool_t"] + params["b_pool"]

    r1 = ref_encode(input_ids_1, attention_mask_1)
    r2 = ref_encode(input_ids_2, attention_mask_2)
    ref_logits = (
        jnp.concatenate([r1, r2, jnp.abs(r1 - r2)], axis=1) @ params["w_cls_t"]
        + params["b_cls"]
    )
    assert jnp.allclose(e1, r1, atol=1e-4, rtol=1e-4), "embedding 1 mismatch"
    assert jnp.allclose(e2, r2, atol=1e-4, rtol=1e-4), "embedding 2 mismatch"
    assert jnp.allclose(logits, ref_logits, atol=1e-4, rtol=1e-4), "logits mismatch"
    assert logits.shape == (B, NCLS) and e1.shape == (B, D) and e2.shape == (B, D)

    print("KERNEL_OK")
</pallas_src>

<mosaic_0001>
module attributes {stable_mosaic.version = 11 : i64} {
  func.func @fused_sbert_kernel(%arg0: i32, %arg1: memref<8x16x128xbf16, #tpu.memory_space<vmem>>, %arg2: memref<8x16x128xbf16, #tpu.memory_space<vmem>>, %arg3: memref<8x16x1xf32, #tpu.memory_space<vmem>>, %arg4: memref<8x16x1xf32, #tpu.memory_space<vmem>>, %arg5: memref<128x128xf32, #tpu.memory_space<vmem>>, %arg6: memref<1x128xf32, #tpu.memory_space<vmem>>, %arg7: memref<128x128xf32, #tpu.memory_space<vmem>>, %arg8: memref<128x128xf32, #tpu.memory_space<vmem>>, %arg9: memref<128x128xf32, #tpu.memory_space<vmem>>, %arg10: memref<1x128xf32, #tpu.memory_space<vmem>>, %arg11: memref<8x128xf32, #tpu.memory_space<vmem>>, %arg12: memref<8x128xf32, #tpu.memory_space<vmem>>, %arg13: memref<8x128xf32, #tpu.memory_space<vmem>>) attributes {dimension_semantics = [#tpu.dimension_semantics<parallel>], iteration_bounds = array<i64: 2>, scalar_prefetch = 0 : i64, scratch_operands = 0 : i64, tpu.core_type = #tpu.core_type<tc>, window_params = [{transform_indices = @transform_0, window_bounds = array<i64: 8, 16, 128>}, {transform_indices = @transform_1, window_bounds = array<i64: 8, 16, 128>}, {transform_indices = @transform_2, window_bounds = array<i64: 8, 16, 1>}, {transform_indices = @transform_3, window_bounds = array<i64: 8, 16, 1>}, {pipeline_mode = #tpu.pipeline_mode<synchronous>, transform_indices = @transform_4, window_bounds = array<i64: 128, 128>}, {pipeline_mode = #tpu.pipeline_mode<synchronous>, transform_indices = @transform_5, window_bounds = array<i64: 1, 128>}, {pipeline_mode = #tpu.pipeline_mode<synchronous>, transform_indices = @transform_6, window_bounds = array<i64: 128, 128>}, {pipeline_mode = #tpu.pipeline_mode<synchronous>, transform_indices = @transform_7, window_bounds = array<i64: 128, 128>}, {pipeline_mode = #tpu.pipeline_mode<synchronous>, transform_indices = @transform_8, window_bounds = array<i64: 128, 128>}, {pipeline_mode = #tpu.pipeline_mode<synchronous>, transform_indices = @transform_9, window_bounds = array<i64: 1, 128>}, {transform_indices = @transform_10, window_bounds = array<i64: 8, 128>}, {transform_indices = @transform_11, window_bounds = array<i64: 8, 128>}, {transform_indices = @transform_12, window_bounds = array<i64: 8, 128>}]} {
    %c0 = arith.constant 0 : index
    %c0_0 = arith.constant 0 : index
    %c0_1 = arith.constant 0 : index
    %0 = vector.load %arg1[%c0, %c0_0, %c0_1] : memref<8x16x128xbf16, #tpu.memory_space<vmem>>, vector<8x16x128xbf16>
    %c0_2 = arith.constant 0 : index
    %c0_3 = arith.constant 0 : index
    %c0_4 = arith.constant 0 : index
    %1 = vector.load %arg3[%c0_2, %c0_3, %c0_4] : memref<8x16x1xf32, #tpu.memory_space<vmem>>, vector<8x16x1xf32>
    %2 = arith.extf %0 : vector<8x16x128xbf16> to vector<8x16x128xf32>
    %3 = vector.broadcast %1 : vector<8x16x1xf32> to vector<8x16x128xf32>
    %4 = arith.mulf %2, %3 : vector<8x16x128xf32>
    %cst = arith.constant dense<0.000000e+00> : vector<8x128xf32>
    %5 = vector.multi_reduction <add>, %4, %cst [1] : vector<8x16x128xf32> to vector<8x128xf32>
    %c0_5 = arith.constant 0 : index
    %c0_6 = arith.constant 0 : index
    %c0_7 = arith.constant 0 : index
    %6 = vector.load %arg2[%c0_5, %c0_6, %c0_7] : memref<8x16x128xbf16, #tpu.memory_space<vmem>>, vector<8x16x128xbf16>
    %c0_8 = arith.constant 0 : index
    %c0_9 = arith.constant 0 : index
    %c0_10 = arith.constant 0 : index
    %7 = vector.load %arg4[%c0_8, %c0_9, %c0_10] : memref<8x16x1xf32, #tpu.memory_space<vmem>>, vector<8x16x1xf32>
    %8 = arith.extf %6 : vector<8x16x128xbf16> to vector<8x16x128xf32>
    %9 = vector.broadcast %7 : vector<8x16x1xf32> to vector<8x16x128xf32>
    %10 = arith.mulf %8, %9 : vector<8x16x128xf32>
    %cst_11 = arith.constant dense<0.000000e+00> : vector<8x128xf32>
    %11 = vector.multi_reduction <add>, %10, %cst_11 [1] : vector<8x16x128xf32> to vector<8x128xf32>
    %c0_12 = arith.constant 0 : index
    %c0_13 = arith.constant 0 : index
    %12 = vector.load %arg5[%c0_12, %c0_13] : memref<128x128xf32, #tpu.memory_space<vmem>>, vector<128x128xf32>
    %c0_14 = arith.constant 0 : index
    %c0_15 = arith.constant 0 : index
    %13 = vector.load %arg6[%c0_14, %c0_15] : memref<1x128xf32, #tpu.memory_space<vmem>>, vector<1x128xf32>
    %cst_16 = arith.constant dense<0.000000e+00> : vector<8x128xf32>
    %14 = tpu.matmul %5, %12, %cst_16 {dimension_numbers = #tpu.dot_dimension_numbers<[1], [0], [0], [1], [0, 0, 1, 1], [], []>} : vector<8x128xf32>, vector<128x128xf32>, vector<8x128xf32> -> vector<8x128xf32>
    %15 = vector.broadcast %13 : vector<1x128xf32> to vector<8x128xf32>
    %16 = arith.addf %14, %15 : vector<8x128xf32>
    %cst_17 = arith.constant dense<0.000000e+00> : vector<8x128xf32>
    %17 = tpu.matmul %11, %12, %cst_17 {dimension_numbers = #tpu.dot_dimension_numbers<[1], [0], [0], [1], [0, 0, 1, 1], [], []>} : vector<8x128xf32>, vector<128x128xf32>, vector<8x128xf32> -> vector<8x128xf32>
    %18 = vector.broadcast %13 : vector<1x128xf32> to vector<8x128xf32>
    %19 = arith.addf %17, %18 : vector<8x128xf32>
    %c0_18 = arith.constant 0 : index
    %c0_19 = arith.constant 0 : index
    %20 = vector.load %arg11[%c0_18, %c0_19] : memref<8x128xf32, #tpu.memory_space<vmem>>, vector<8x128xf32>
    tpu.vector_store %arg11[%c0_18, %c0_19], %16 {strides = array<i32>} : memref<8x128xf32, #tpu.memory_space<vmem>>, vector<8x128xf32>,
    %c0_20 = arith.constant 0 : index
    %c0_21 = arith.constant 0 : index
    %21 = vector.load %arg12[%c0_20, %c0_21] : memref<8x128xf32, #tpu.memory_space<vmem>>, vector<8x128xf32>
    tpu.vector_store %arg12[%c0_20, %c0_21], %19 {strides = array<i32>} : memref<8x128xf32, #tpu.memory_space<vmem>>, vector<8x128xf32>,
    %22 = arith.subf %16, %19 : vector<8x128xf32>
    %23 = math.absf %22 : vector<8x128xf32>
    %c0_22 = arith.constant 0 : index
    %c0_23 = arith.constant 0 : index
    %24 = vector.load %arg7[%c0_22, %c0_23] : memref<128x128xf32, #tpu.memory_space<vmem>>, vector<128x128xf32>
    %cst_24 = arith.constant dense<0.000000e+00> : vector<8x128xf32>
    %25 = tpu.matmul %16, %24, %cst_24 {dimension_numbers = #tpu.dot_dimension_numbers<[1], [0], [0], [1], [0, 0, 1, 1], [], []>} : vector<8x128xf32>, vector<128x128xf32>, vector<8x128xf32> -> vector<8x128xf32>
    %c0_25 = arith.constant 0 : index
    %c0_26 = arith.constant 0 : index
    %26 = vector.load %arg8[%c0_25, %c0_26] : memref<128x128xf32, #tpu.memory_space<vmem>>, vector<128x128xf32>
    %cst_27 = arith.constant dense<0.000000e+00> : vector<8x128xf32>
    %27 = tpu.matmul %19, %26, %cst_27 {dimension_numbers = #tpu.dot_dimension_numbers<[1], [0], [0], [1], [0, 0, 1, 1], [], []>} : vector<8x128xf32>, vector<128x128xf32>, vector<8x128xf32> -> vector<8x128xf32>
    %28 = arith.addf %25, %27 : vector<8x128xf32>
    %c0_28 = arith.constant 0 : index
    %c0_29 = arith.constant 0 : index
    %29 = vector.load %arg9[%c0_28, %c0_29] : memref<128x128xf32, #tpu.memory_space<vmem>>, vector<128x128xf32>
    %cst_30 = arith.constant dense<0.000000e+00> : vector<8x128xf32>
    %30 = tpu.matmul %23, %29, %cst_30 {dimension_numbers = #tpu.dot_dimension_numbers<[1], [0], [0], [1], [0, 0, 1, 1], [], []>} : vector<8x128xf32>, vector<128x128xf32>, vector<8x128xf32> -> vector<8x128xf32>
    %31 = arith.addf %28, %30 : vector<8x128xf32>
    %c0_31 = arith.constant 0 : index
    %c0_32 = arith.constant 0 : index
    %32 = vector.load %arg10[%c0_31, %c0_32] : memref<1x128xf32, #tpu.memory_space<vmem>>, vector<1x128xf32>
    %33 = vector.broadcast %32 : vector<1x128xf32> to vector<8x128xf32>
    %34 = arith.addf %31, %33 : vector<8x128xf32>
    %c0_33 = arith.constant 0 : index
    %c0_34 = arith.constant 0 : index
    %35 = vector.load %arg13[%c0_33, %c0_34] : memref<8x128xf32, #tpu.memory_space<vmem>>, vector<8x128xf32>
    tpu.vector_store %arg13[%c0_33, %c0_34], %34 {strides = array<i32>} : memref<8x128xf32, #tpu.memory_space<vmem>>, vector<8x128xf32>,
    return
  }
  func.func @transform_0(%arg0: i32) -> (i32, i32, i32) {
    %c0_i32 = arith.constant 0 : i32
    %c0_i32_0 = arith.constant 0 : i32
    %c0_i32_1 = arith.constant 0 : i32
    return %arg0, %c0_i32, %c0_i32_0 : i32, i32, i32
  }
  func.func @transform_1(%arg0: i32) -> (i32, i32, i32) {
    %c0_i32 = arith.constant 0 : i32
    %c0_i32_0 = arith.constant 0 : i32
    %c0_i32_1 = arith.constant 0 : i32
    return %arg0, %c0_i32, %c0_i32_0 : i32, i32, i32
  }
  func.func @transform_2(%arg0: i32) -> (i32, i32, i32) {
    %c0_i32 = arith.constant 0 : i32
    %c0_i32_0 = arith.constant 0 : i32
    %c0_i32_1 = arith.constant 0 : i32
    return %arg0, %c0_i32, %c0_i32_0 : i32, i32, i32
  }
  func.func @transform_3(%arg0: i32) -> (i32, i32, i32) {
    %c0_i32 = arith.constant 0 : i32
    %c0_i32_0 = arith.constant 0 : i32
    %c0_i32_1 = arith.constant 0 : i32
    return %arg0, %c0_i32, %c0_i32_0 : i32, i32, i32
  }
  func.func @transform_4(%arg0: i32) -> (i32, i32) {
    %c0_i32 = arith.constant 0 : i32
    %c0_i32_0 = arith.constant 0 : i32
    %c0_i32_1 = arith.constant 0 : i32
    return %c0_i32, %c0_i32_0 : i32, i32
  }
  func.func @transform_5(%arg0: i32) -> (i32, i32) {
    %c0_i32 = arith.constant 0 : i32
    %c0_i32_0 = arith.constant 0 : i32
    %c0_i32_1 = arith.constant 0 : i32
    return %c0_i32, %c0_i32_0 : i32, i32
  }
  func.func @transform_6(%arg0: i32) -> (i32, i32) {
    %c0_i32 = arith.constant 0 : i32
    %c0_i32_0 = arith.constant 0 : i32
    %c0_i32_1 = arith.constant 0 : i32
    return %c0_i32, %c0_i32_0 : i32, i32
  }
  func.func @transform_7(%arg0: i32) -> (i32, i32) {
    %c0_i32 = arith.constant 0 : i32
    %c0_i32_0 = arith.constant 0 : i32
    %c0_i32_1 = arith.constant 0 : i32
    return %c0_i32, %c0_i32_0 : i32, i32
  }
  func.func @transform_8(%arg0: i32) -> (i32, i32) {
    %c0_i32 = arith.constant 0 : i32
    %c0_i32_0 = arith.constant 0 : i32
    %c0_i32_1 = arith.constant 0 : i32
    return %c0_i32, %c0_i32_0 : i32, i32
  }
  func.func @transform_9(%arg0: i32) -> (i32, i32) {
    %c0_i32 = arith.constant 0 : i32
    %c0_i32_0 = arith.constant 0 : i32
    %c0_i32_1 = arith.constant 0 : i32
    return %c0_i32, %c0_i32_0 : i32, i32
  }
  func.func @transform_10(%arg0: i32) -> (i32, i32) {
    %c0_i32 = arith.constant 0 : i32
    %c0_i32_0 = arith.constant 0 : i32
    return %arg0, %c0_i32 : i32, i32
  }
  func.func @transform_11(%arg0: i32) -> (i32, i32) {
    %c0_i32 = arith.constant 0 : i32
    %c0_i32_0 = arith.constant 0 : i32
    return %arg0, %c0_i32 : i32, i32
  }
  func.func @transform_12(%arg0: i32) -> (i32, i32) {
    %c0_i32 = arith.constant 0 : i32
    %c0_i32_0 = arith.constant 0 : i32
    return %arg0, %c0_i32 : i32, i32
  }
}

</mosaic_0001>

<llo_original>
// kernel: sentence_bert_forward.1
$region0: #{sentence_bert_forward.1}
  #allocation0 [shape = 'u32[]', space=smem, size = 0x4, offset = 0x4, fixed_abs, tag = 'smem constant byte address 0x4 - core index']
  #allocation1 [shape = 'u32[144,128]{1,0:T(1,128)}', space=vmem, size = 0x12000, scoped, tag = 'internal scratch']
  %s0 = inlined_call_operand.vmem [shape: bf16[16,16,128], index: 0, kind: input, shape index: {}]
  %s1 = inlined_call_operand.vmem [shape: bf16[16,16,128], index: 1, kind: input, shape index: {}]
  %s2 = inlined_call_operand.vmem [shape: f32[16,16,1], index: 2, kind: input, shape index: {}]
  %s3 = inlined_call_operand.vmem [shape: f32[16,16,1], index: 3, kind: input, shape index: {}]
  %s4 = inlined_call_operand.vmem [shape: f32[128,128], index: 4, kind: input, shape index: {}]
  %s5 = inlined_call_operand.vmem [shape: f32[1,128], index: 5, kind: input, shape index: {}]
  %s6 = inlined_call_operand.vmem [shape: f32[128,128], index: 6, kind: input, shape index: {}]
  %s7 = inlined_call_operand.vmem [shape: f32[128,128], index: 7, kind: input, shape index: {}]
  %s8 = inlined_call_operand.vmem [shape: f32[128,128], index: 8, kind: input, shape index: {}]
  %s9 = inlined_call_operand.vmem [shape: f32[1,128], index: 9, kind: input, shape index: {}]
  %s10 = inlined_call_operand.hbm [shape: f32[16,128], index: 10, kind: output, shape index: {0}]
  %s11 = inlined_call_operand.hbm [shape: f32[16,128], index: 11, kind: output, shape index: {1}]
  %s12 = inlined_call_operand.vmem [shape: f32[16,128], index: 12, kind: output, shape index: {2}]
  %13 = xla_tuple %s10, %s11, %s12
  %s14 = sld [smem:[#allocation0]]
  $region89: #{sentence_bert_forward.1} parent=0
    _
  %s16 = ssub.s32 1, %s14
  %s17 = scalar_select 0, %s16, %s14
  $region1: #{sentence_bert_forward.1} parent=0
    #allocation2 [shape = 'u8[8192]{0}', space=vmem, size = 0x2000, scoped, tag = 'output window, operand 0']
    #allocation3 [shape = 's32[2]{0}', space=sflag, size = 0x8, scoped, tag = 'scoped memory for sentence_bert_forward.1']
    #allocation4 [shape = 'u8[8192]{0}', space=vmem, size = 0x2000, scoped, tag = 'output window, operand 1']
    #allocation5 [shape = 's32[2]{0}', space=sflag, size = 0x8, scoped, tag = 'scoped memory for sentence_bert_forward.1']
    %18 = vsyncpa [#allocation3], 0
    %s19 = scalar_lea.sflag [#allocation3], 1
    %20 = vsyncpa %s19, 0
    %21 = vsyncpa [#allocation5], 0
    %s22 = scalar_lea.sflag [#allocation5], 1
    %23 = vsyncpa %s22, 0
    loop: start=0, step=1, limit=4
    $region2: #{sentence_bert_forward.1} parent=1 // loop_pre_header
      _
    $region3: #{sentence_bert_forward.1} parent=1 // loop_header
      %s25 = sphi 0, %s29
      %p26 = scmp.ge.s32.totalorder %s25, 4
      %s35 = sphi 0, %s37
      %s38 = sphi 0, %s35
      %s39 = sphi 0, %s38
      %s55 = sphi 0, %s39
      %s61 = sphi 0, %s63
      %s64 = sphi 0, %s61
      %s65 = sphi 0, %s64
      %s81 = sphi 0, %s65
      %s87 = sphi 0, %s89
      %s90 = sphi 0, %s87
      %s91 = sphi 0, %s90
      %s107 = sphi 0, %s91
      %s113 = sphi 0, %s115
      %s116 = sphi 0, %s113
      %s117 = sphi 0, %s116
      %s133 = sphi 0, %s117
      %s137 = sphi 0, %s137
      %s139 = sphi 0, %s137
      %s140 = sphi 0, %s139
      %s154 = sphi 0, %s140
      %s158 = sphi 0, %s158
      %s160 = sphi 0, %s158
      %s161 = sphi 0, %s160
      %s175 = sphi 0, %s161
      %s179 = sphi 0, %s179
      %s181 = sphi 0, %s179
      %s182 = sphi 0, %s181
      %s196 = sphi 0, %s182
      %s200 = sphi 0, %s200
      %s202 = sphi 0, %s200
      %s203 = sphi 0, %s202
      %s217 = sphi 0, %s203
      %s221 = sphi 0, %s221
      %s223 = sphi 0, %s221
      %s224 = sphi 0, %s223
      %s238 = sphi 0, %s224
      %s242 = sphi 0, %s242
      %s244 = sphi 0, %s242
      %s245 = sphi 0, %s244
      %s259 = sphi 0, %s245
      %s265 = sphi 0, %s267
      %s268 = sphi 0, %s265
      %s269 = sphi 0, %s268
      %s285 = sphi 0, %s269
      %s291 = sphi 0, %s293
      %s294 = sphi 0, %s291
      %s295 = sphi 0, %s294
      %s311 = sphi 0, %s295
      %s317 = sphi 0, %s319
      %s320 = sphi 0, %s317
      %s321 = sphi 0, %s320
      %s337 = sphi 0, %s321
    $region4: #{sentence_bert_forward.1} parent=1 // loop_header_branch
      %28 = sbr.rel (%p26) target = $region8
    $region5: #{sentence_bert_forward.1} parent=1 // loop_body
      %s30 = ssub.s32 %s25, 1
      %s31 = ssub.s32 %s25, 2
      %s32 = sadd.s32 %s25, 1
      %s33 = ssub.s32 %s25, %s32
      %p34 = scmp.eq.s32.totalorder %s33, 0
      %s36 = sadd.s32 %s35, 1
      %s37 = scalar_select %p34, %s35, %s36
      %p40 = pneg %p34
      %p41 = scmp.eq.s32.totalorder %s25, 1
      %p42 = por %p40, %p41
      %p43 = scmp.ne.s32.totalorder %s35, %s38
      %p44 = scmp.eq.s32.totalorder %s25, 0
      %p45 = por %p43, %p44
      %p46 = scmp.ne.s32.totalorder %s35, %s38
      %p47 = scmp.eq.s32.totalorder %s30, 1
      %p48 = por %p46, %p47
      %p49 = scmp.ne.s32.totalorder %s38, %s39
      %p50 = scmp.eq.s32.totalorder %s30, 0
      %p51 = por %p49, %p50
      %p52 = scmp.ne.s32.totalorder %s38, %s39
      %p53 = scmp.eq.s32.totalorder %s31, 1
      %p54 = por %p52, %p53
      %p56 = scmp.ne.s32.totalorder %s39, %s55
      %p57 = scmp.eq.s32.totalorder %s31, 0
      %p58 = por %p56, %p57
      %s59 = ssub.s32 %s25, %s32
      %p60 = scmp.eq.s32.totalorder %s59, 0
      %s62 = sadd.s32 %s61, 1
      %s63 = scalar_select %p60, %s61, %s62
      %p66 = pneg %p60
      %p67 = scmp.eq.s32.totalorder %s25, 1
      %p68 = por %p66, %p67
      %p69 = scmp.ne.s32.totalorder %s61, %s64
      %p70 = scmp.eq.s32.totalorder %s25, 0
      %p71 = por %p69, %p70
      %p72 = scmp.ne.s32.totalorder %s61, %s64
      %p73 = scmp.eq.s32.totalorder %s30, 1
      %p74 = por %p72, %p73
      %p75 = scmp.ne.s32.totalorder %s64, %s65
      %p76 = scmp.eq.s32.totalorder %s30, 0
      %p77 = por %p75, %p76
      %p78 = scmp.ne.s32.totalorder %s64, %s65
      %p79 = scmp.eq.s32.totalorder %s31, 1
      %p80 = por %p78, %p79
      %p82 = scmp.ne.s32.totalorder %s65, %s81
      %p83 = scmp.eq.s32.totalorder %s31, 0
      %p84 = por %p82, %p83
      %s85 = ssub.s32 %s25, %s32
      %p86 = scmp.eq.s32.totalorder %s85, 0
      %s88 = sadd.s32 %s87, 1
      %s89 = scalar_select %p86, %s87, %s88
      %p92 = pneg %p86
      %p93 = scmp.eq.s32.totalorder %s25, 1
      %p94 = por %p92, %p93
      %p95 = scmp.ne.s32.totalorder %s87, %s90
      %p96 = scmp.eq.s32.totalorder %s25, 0
      %p97 = por %p95, %p96
      %p98 = scmp.ne.s32.totalorder %s87, %s90
      %p99 = scmp.eq.s32.totalorder %s30, 1
      %p100 = por %p98, %p99
      %p101 = scmp.ne.s32.totalorder %s90, %s91
      %p102 = scmp.eq.s32.totalorder %s30, 0
      %p103 = por %p101, %p102
      %p104 = scmp.ne.s32.totalorder %s90, %s91
      %p105 = scmp.eq.s32.totalorder %s31, 1
      %p106 = por %p104, %p105
      %p108 = scmp.ne.s32.totalorder %s91, %s107
      %p109 = scmp.eq.s32.totalorder %s31, 0
      %p110 = por %p108, %p109
      %s111 = ssub.s32 %s25, %s32
      %p112 = scmp.eq.s32.totalorder %s111, 0
      %s114 = sadd.s32 %s113, 1
      %s115 = scalar_select %p112, %s113, %s114
      %p118 = pneg %p112
      %p119 = scmp.eq.s32.totalorder %s25, 1
      %p120 = por %p118, %p119
      %p121 = scmp.ne.s32.totalorder %s113, %s116
      %p122 = scmp.eq.s32.totalorder %s25, 0
      %p123 = por %p121, %p122
      %p124 = scmp.ne.s32.totalorder %s113, %s116
      %p125 = scmp.eq.s32.totalorder %s30, 1
      %p126 = por %p124, %p125
      %p127 = scmp.ne.s32.totalorder %s116, %s117
      %p128 = scmp.eq.s32.totalorder %s30, 0
      %p129 = por %p127, %p128
      %p130 = scmp.ne.s32.totalorder %s116, %s117
      %p131 = scmp.eq.s32.totalorder %s31, 1
      %p132 = por %p130, %p131
      %p134 = scmp.ne.s32.totalorder %s117, %s133
      %p135 = scmp.eq.s32.totalorder %s31, 0
      %p136 = por %p134, %p135
      %s138 = sadd.s32 %s137, 1
      %p141 = scmp.eq.s32.totalorder %s25, 1
      %p142 = scmp.ne.s32.totalorder %s137, %s139
      %p143 = scmp.eq.s32.totalorder %s25, 0
      %p144 = por %p142, %p143
      %p145 = scmp.ne.s32.totalorder %s137, %s139
      %p146 = scmp.eq.s32.totalorder %s30, 1
      %p147 = por %p145, %p146
      %p148 = scmp.ne.s32.totalorder %s139, %s140
      %p149 = scmp.eq.s32.totalorder %s30, 0
      %p150 = por %p148, %p149
      %p151 = scmp.ne.s32.totalorder %s139, %s140
      %p152 = scmp.eq.s32.totalorder %s31, 1
      %p153 = por %p151, %p152
      %p155 = scmp.ne.s32.totalorder %s140, %s154
      %p156 = scmp.eq.s32.totalorder %s31, 0
      %p157 = por %p155, %p156
      %s159 = sadd.s32 %s158, 1
      %p162 = scmp.eq.s32.totalorder %s25, 1
      %p163 = scmp.ne.s32.totalorder %s158, %s160
      %p164 = scmp.eq.s32.totalorder %s25, 0
      %p165 = por %p163, %p164
      %p166 = scmp.ne.s32.totalorder %s158, %s160
      %p167 = scmp.eq.s32.totalorder %s30, 1
      %p168 = por %p166, %p167
      %p169 = scmp.ne.s32.totalorder %s160, %s161
      %p170 = scmp.eq.s32.totalorder %s30, 0
      %p171 = por %p169, %p170
      %p172 = scmp.ne.s32.totalorder %s160, %s161
      %p173 = scmp.eq.s32.totalorder %s31, 1
      %p174 = por %p172, %p173
      %p176 = scmp.ne.s32.totalorder %s161, %s175
      %p177 = scmp.eq.s32.totalorder %s31, 0
      %p178 = por %p176, %p177
      %s180 = sadd.s32 %s179, 1
      %p183 = scmp.eq.s32.totalorder %s25, 1
      %p184 = scmp.ne.s32.totalorder %s179, %s181
      %p185 = scmp.eq.s32.totalorder %s25, 0
      %p186 = por %p184, %p185
      %p187 = scmp.ne.s32.totalorder %s179, %s181
      %p188 = scmp.eq.s32.totalorder %s30, 1
      %p189 = por %p187, %p188
      %p190 = scmp.ne.s32.totalorder %s181, %s182
      %p191 = scmp.eq.s32.totalorder %s30, 0
      %p192 = por %p190, %p191
      %p193 = scmp.ne.s32.totalorder %s181, %s182
      %p194 = scmp.eq.s32.totalorder %s31, 1
      %p195 = por %p193, %p194
      %p197 = scmp.ne.s32.totalorder %s182, %s196
      %p198 = scmp.eq.s32.totalorder %s31, 0
      %p199 = por %p197, %p198
      %s201 = sadd.s32 %s200, 1
      %p204 = scmp.eq.s32.totalorder %s25, 1
      %p205 = scmp.ne.s32.totalorder %s200, %s202
      %p206 = scmp.eq.s32.totalorder %s25, 0
      %p207 = por %p205, %p206
      %p208 = scmp.ne.s32.totalorder %s200, %s202
      %p209 = scmp.eq.s32.totalorder %s30, 1
      %p210 = por %p208, %p209
      %p211 = scmp.ne.s32.totalorder %s202, %s203
      %p212 = scmp.eq.s32.totalorder %s30, 0
      %p213 = por %p211, %p212
      %p214 = scmp.ne.s32.totalorder %s202, %s203
      %p215 = scmp.eq.s32.totalorder %s31, 1
      %p216 = por %p214, %p215
      %p218 = scmp.ne.s32.totalorder %s203, %s217
      %p219 = scmp.eq.s32.totalorder %s31, 0
      %p220 = por %p218, %p219
      %s222 = sadd.s32 %s221, 1
      %p225 = scmp.eq.s32.totalorder %s25, 1
      %p226 = scmp.ne.s32.totalorder %s221, %s223
      %p227 = scmp.eq.s32.totalorder %s25, 0
      %p228 = por %p226, %p227
      %p229 = scmp.ne.s32.totalorder %s221, %s223
      %p230 = scmp.eq.s32.totalorder %s30, 1
      %p231 = por %p229, %p230
      %p232 = scmp.ne.s32.totalorder %s223, %s224
      %p233 = scmp.eq.s32.totalorder %s30, 0
      %p234 = por %p232, %p233
      %p235 = scmp.ne.s32.totalorder %s223, %s224
      %p236 = scmp.eq.s32.totalorder %s31, 1
      %p237 = por %p235, %p236
      %p239 = scmp.ne.s32.totalorder %s224, %s238
      %p240 = scmp.eq.s32.totalorder %s31, 0
      %p241 = por %p239, %p240
      %s243 = sadd.s32 %s242, 1
      %p246 = scmp.eq.s32.totalorder %s25, 1
      %p247 = scmp.ne.s32.totalorder %s242, %s244
      %p248 = scmp.eq.s32.totalorder %s25, 0
      %p249 = por %p247, %p248
      %p250 = scmp.ne.s32.totalorder %s242, %s244
      %p251 = scmp.eq.s32.totalorder %s30, 1
      %p252 = por %p250, %p251
      %p253 = scmp.ne.s32.totalorder %s244, %s245
      %p254 = scmp.eq.s32.totalorder %s30, 0
      %p255 = por %p253, %p254
      %p256 = scmp.ne.s32.totalorder %s244, %s245
      %p257 = scmp.eq.s32.totalorder %s31, 1
      %p258 = por %p256, %p257
      %p260 = scmp.ne.s32.totalorder %s245, %s259
      %p261 = scmp.eq.s32.totalorder %s31, 0
      %p262 = por %p260, %p261
      %s263 = ssub.s32 %s25, %s32
      %p264 = scmp.eq.s32.totalorder %s263, 0
      %s266 = sadd.s32 %s265, 1
      %s267 = scalar_select %p264, %s265, %s266
      %p270 = pneg %p264
      %p271 = scmp.eq.s32.totalorder %s25, 1
      %p272 = por %p270, %p271
      %p273 = scmp.ne.s32.totalorder %s265, %s268
      %p274 = scmp.eq.s32.totalorder %s25, 0
      %p275 = por %p273, %p274
      %p276 = scmp.ne.s32.totalorder %s265, %s268
      %p277 = scmp.eq.s32.totalorder %s30, 1
      %p278 = por %p276, %p277
      %p279 = scmp.ne.s32.totalorder %s268, %s269
      %p280 = scmp.eq.s32.totalorder %s30, 0
      %p281 = por %p279, %p280
      %p282 = scmp.ne.s32.totalorder %s268, %s269
      %p283 = scmp.eq.s32.totalorder %s31, 1
      %p284 = por %p282, %p283
      %p286 = scmp.ne.s32.totalorder %s269, %s285
      %p287 = scmp.eq.s32.totalorder %s31, 0
      %p288 = por %p286, %p287
      %s289 = ssub.s32 %s25, %s32
      %p290 = scmp.eq.s32.totalorder %s289, 0
      %s292 = sadd.s32 %s291, 1
      %s293 = scalar_select %p290, %s291, %s292
      %p296 = pneg %p290
      %p297 = scmp.eq.s32.totalorder %s25, 1
      %p298 = por %p296, %p297
      %p299 = scmp.ne.s32.totalorder %s291, %s294
      %p300 = scmp.eq.s32.totalorder %s25, 0
      %p301 = por %p299, %p300
      %p302 = scmp.ne.s32.totalorder %s291, %s294
      %p303 = scmp.eq.s32.totalorder %s30, 1
      %p304 = por %p302, %p303
      %p305 = scmp.ne.s32.totalorder %s294, %s295
      %p306 = scmp.eq.s32.totalorder %s30, 0
      %p307 = por %p305, %p306
      %p308 = scmp.ne.s32.totalorder %s294, %s295
      %p309 = scmp.eq.s32.totalorder %s31, 1
      %p310 = por %p308, %p309
      %p312 = scmp.ne.s32.totalorder %s295, %s311
      %p313 = scmp.eq.s32.totalorder %s31, 0
      %p314 = por %p312, %p313
      %s315 = ssub.s32 %s25, %s32
      %p316 = scmp.eq.s32.totalorder %s315, 0
      %s318 = sadd.s32 %s317, 1
      %s319 = scalar_select %p316, %s317, %s318
      %p322 = pneg %p316
      %p323 = scmp.eq.s32.totalorder %s25, 1
      %p324 = por %p322, %p323
      %p325 = scmp.ne.s32.totalorder %s317, %s320
      %p326 = scmp.eq.s32.totalorder %s25, 0
      %p327 = por %p325, %p326
      %p328 = scmp.ne.s32.totalorder %s317, %s320
      %p329 = scmp.eq.s32.totalorder %s30, 1
      %p330 = por %p328, %p329
      %p331 = scmp.ne.s32.totalorder %s320, %s321
      %p332 = scmp.eq.s32.totalorder %s30, 0
      %p333 = por %p331, %p332
      %p334 = scmp.ne.s32.totalorder %s320, %s321
      %p335 = scmp.eq.s32.totalorder %s31, 1
      %p336 = por %p334, %p335
      %p338 = scmp.ne.s32.totalorder %s321, %s337
      %p339 = scmp.eq.s32.totalorder %s31, 0
      %p340 = por %p338, %p339
      %p341 = scmp.le.s32.totalorder 1, %s25
      %p342 = scmp.lt.s32.totalorder %s25, 3
      %p343 = pnand %p341, %p342
      %p344 = pneg %p343
      // Predicated region
      $region9: #{sentence_bert_forward.1} parent=5 // pred_check
        _
      $region10: #{sentence_bert_forward.1} parent=5 // pred_check_branch
        %346 = sbr.rel (%p343) target = $region12
      $region11: #{sentence_bert_forward.1} parent=5 // pred_region
        %s347 = ssub.s32 %s25, 1
        // Predicated region
        $region13: #{sentence_bert_forward.1} parent=11 // pred_check
          %p348 = pneg %p150
        $region14: #{sentence_bert_forward.1} parent=11 // pred_check_branch
          %350 = sbr.rel (%p348) target = $region16
        $region15: #{sentence_bert_forward.1} parent=11 // pred_region
          _
        $region16: #{sentence_bert_forward.1} parent=11 // pred_fallthru
          _
        // Predicated region
        $region17: #{sentence_bert_forward.1} parent=11 // pred_check
          %p351 = pneg %p171
        $region18: #{sentence_bert_forward.1} parent=11 // pred_check_branch
          %353 = sbr.rel (%p351) target = $region20
        $region19: #{sentence_bert_forward.1} parent=11 // pred_region
          _
        $region20: #{sentence_bert_forward.1} parent=11 // pred_fallthru
          _
        // Predicated region
        $region21: #{sentence_bert_forward.1} parent=11 // pred_check
          %p354 = pneg %p192
        $region22: #{sentence_bert_forward.1} parent=11 // pred_check_branch
          %356 = sbr.rel (%p354) target = $region24
        $region23: #{sentence_bert_forward.1} parent=11 // pred_region
          _
        $region24: #{sentence_bert_forward.1} parent=11 // pred_fallthru
          _
        // Predicated region
        $region25: #{sentence_bert_forward.1} parent=11 // pred_check
          %p357 = pneg %p213
        $region26: #{sentence_bert_forward.1} parent=11 // pred_check_branch
          %359 = sbr.rel (%p357) target = $region28
        $region27: #{sentence_bert_forward.1} parent=11 // pred_region
          _
        $region28: #{sentence_bert_forward.1} parent=11 // pred_fallthru
          _
        // Predicated region
        $region29: #{sentence_bert_forward.1} parent=11 // pred_check
          %p360 = pneg %p234
        $region30: #{sentence_bert_forward.1} parent=11 // pred_check_branch
          %362 = sbr.rel (%p360) target = $region32
        $region31: #{sentence_bert_forward.1} parent=11 // pred_region
          _
        $region32: #{sentence_bert_forward.1} parent=11 // pred_fallthru
          _
        // Predicated region
        $region33: #{sentence_bert_forward.1} parent=11 // pred_check
          %p363 = pneg %p255
        $region34: #{sentence_bert_forward.1} parent=11 // pred_check_branch
          %365 = sbr.rel (%p363) target = $region36
        $region35: #{sentence_bert_forward.1} parent=11 // pred_region
          _
        $region36: #{sentence_bert_forward.1} parent=11 // pred_fallthru
          _
      $region12: #{sentence_bert_forward.1} parent=5 // pred_fallthru
        _
      %p366 = scmp.lt.s32.totalorder %s25, 2
      // Predicated region
      $region37: #{sentence_bert_forward.1} parent=5 // pred_check
        %p367 = pneg %p366
      $region38: #{sentence_bert_forward.1} parent=5 // pred_check_branch
        %369 = sbr.rel (%p367) target = $region40
      $region39: #{sentence_bert_forward.1} parent=5 // pred_region
        // Predicated region
        $region41: #{sentence_bert_forward.1} parent=39 // pred_check
          %p370 = pneg %p45
        $region42: #{sentence_bert_forward.1} parent=39 // pred_check_branch
          %372 = sbr.rel (%p370) target = $region44
        $region43: #{sentence_bert_forward.1} parent=39 // pred_region
          %s373 = smul.u32 8, %s25
          %p374 = scmp.lt.s32.totalorder %s373, 15
          %s375 = scalar_select %p374, %s373, 15
          %s376 = smul.addr %s375, 2
          %s377 = smul.addr %s376, 4
          %s378 = scalar_lea.vmem %s0, %s377
          %s379 = smul.u32 8, %s25
        $region44: #{sentence_bert_forward.1} parent=39 // pred_fallthru
          _
        // Predicated region
        $region45: #{sentence_bert_forward.1} parent=39 // pred_check
          %p380 = pneg %p71
        $region46: #{sentence_bert_forward.1} parent=39 // pred_check_branch
          %382 = sbr.rel (%p380) target = $region48
        $region47: #{sentence_bert_forward.1} parent=39 // pred_region
          %s383 = smul.u32 8, %s25
          %p384 = scmp.lt.s32.totalorder %s383, 15
          %s385 = scalar_select %p384, %s383, 15
          %s386 = smul.addr %s385, 2
          %s387 = smul.addr %s386, 4
          %s388 = scalar_lea.vmem %s1, %s387
          %s389 = smul.u32 8, %s25
        $region48: #{sentence_bert_forward.1} parent=39 // pred_fallthru
          _
        // Predicated region
        $region49: #{sentence_bert_forward.1} parent=39 // pred_check
          %p390 = pneg %p97
        $region50: #{sentence_bert_forward.1} parent=39 // pred_check_branch
          %392 = sbr.rel (%p390) target = $region52
        $region51: #{sentence_bert_forward.1} parent=39 // pred_region
          %s393 = smul.u32 8, %s25
          %p394 = scmp.lt.s32.totalorder %s393, 15
          %s395 = scalar_select %p394, %s393, 15
          %s396 = smul.addr %s395, 2
          %s397 = smul.addr %s396, 8
          %s398 = scalar_lea.vmem %s2, %s397
          %s399 = smul.u32 8, %s25
        $region52: #{sentence_bert_forward.1} parent=39 // pred_fallthru
          _
        // Predicated region
        $region53: #{sentence_bert_forward.1} parent=39 // pred_check
          %p400 = pneg %p123
        $region54: #{sentence_bert_forward.1} parent=39 // pred_check_branch
          %402 = sbr.rel (%p400) target = $region56
        $region55: #{sentence_bert_forward.1} parent=39 // pred_region
          %s403 = smul.u32 8, %s25
          %p404 = scmp.lt.s32.totalorder %s403, 15
          %s405 = scalar_select %p404, %s403, 15
          %s406 = smul.addr %s405, 2
          %s407 = smul.addr %s406, 8
          %s408 = scalar_lea.vmem %s3, %s407
          %s409 = smul.u32 8, %s25
        $region56: #{sentence_bert_forward.1} parent=39 // pred_fallthru
          _
      $region40: #{sentence_bert_forward.1} parent=5 // pred_fallthru
        _
      %p410 = scmp.le.s32.totalorder 1, %s25
      %p411 = scmp.lt.s32.totalorder %s25, 3
      %p412 = pnand %p410, %p411
      %p413 = pneg %p412
      // Predicated region
      $region57: #{sentence_bert_forward.1} parent=5 // pred_check
        _
      $region58: #{sentence_bert_forward.1} parent=5 // pred_check_branch
        %415 = sbr.rel (%p412) target = $region60
      $region59: #{sentence_bert_forward.1} parent=5 // pred_region
        %s416 = ssub.s32 %s25, 1
        %s417 = smul.u32 8, %s30
        %p418 = scmp.lt.s32.totalorder %s417, 15
        %s419 = scalar_select %p418, %s417, 15
        %s420 = smul.addr %s419, 2
        %s421 = smul.addr %s420, 4
        %s422 = scalar_lea.vmem %s0, %s421
        %p423 = pneg %p51
        %p424 = pneg %p48
        %s425 = smul.u32 8, %s30
        %p426 = scmp.lt.s32.totalorder %s425, 15
        %s427 = scalar_select %p426, %s425, 15
        %s428 = smul.addr %s427, 2
        %s429 = smul.addr %s428, 4
        %s430 = scalar_lea.vmem %s1, %s429
        %p431 = pneg %p77
        %p432 = pneg %p74
        %s433 = smul.u32 8, %s30
        %p434 = scmp.lt.s32.totalorder %s433, 15
        %s435 = scalar_select %p434, %s433, 15
        %s436 = smul.addr %s435, 2
        %s437 = smul.addr %s436, 8
        %s438 = scalar_lea.vmem %s2, %s437
        %p439 = pneg %p103
        %p440 = pneg %p100
        %s441 = smul.u32 8, %s30
        %p442 = scmp.lt.s32.totalorder %s441, 15
        %s443 = scalar_select %p442, %s441, 15
        %s444 = smul.addr %s443, 2
        %s445 = smul.addr %s444, 8
        %s446 = scalar_lea.vmem %s3, %s445
        %p447 = pneg %p129
        %p448 = pneg %p126
        %p449 = pneg %p150
        %p450 = pneg %p147
        %p451 = pneg %p171
        %p452 = pneg %p168
        %p453 = pneg %p192
        %p454 = pneg %p189
        %p455 = pneg %p213
        %p456 = pneg %p210
        %p457 = pneg %p234
        %p458 = pneg %p231
        %p459 = pneg %p255
        %p460 = pneg %p252
        %p461 = pneg %p281
        %p462 = pneg %p278
        %s463 = sand.u32 %s268, 1
        %s464 = scalar_lea.sflag [#allocation3], %s463
        %s465 = sand.u32 %s268, 1
        %s466 = smul.addr %s465, 8
        %s467 = scalar_lea.vmem [#allocation2], %s466
        %p468 = pneg %p307
        %p469 = pneg %p304
        %s470 = sand.u32 %s294, 1
        %s471 = scalar_lea.sflag [#allocation5], %s470
        %s472 = sand.u32 %s294, 1
        %s473 = smul.addr %s472, 8
        %s474 = scalar_lea.vmem [#allocation4], %s473
        %p475 = pneg %p333
        %p476 = pneg %p330
        %p477 = scmp.lt.s32.totalorder %s30, 1
        %s478 = scalar_select %p477, %s30, 1
        %s479 = smul.addr %s478, 8
        %s480 = scalar_lea.vmem %s12, %s479
        %s481 = smul.u32 8, %s30
        %p482 = scmp.lt.s32.totalorder %s481, 15
        %s483 = scalar_select %p482, %s481, 15
        %s484 = smul.addr %s483, 2
        %s485 = smul.addr %s484, 4
        %s486 = scalar_lea.vmem %s0, %s485
        %s487 = smul.u32 8, %s30
        %s488 = smul.u32 8, %s30
        %p489 = scmp.lt.s32.totalorder %s488, 15
        %s490 = scalar_select %p489, %s488, 15
        %s491 = smul.addr %s490, 2
        %s492 = smul.addr %s491, 4
        %s493 = scalar_lea.vmem %s1, %s492
        %s494 = smul.u32 8, %s30
        %s495 = smul.u32 8, %s30
        %p496 = scmp.lt.s32.totalorder %s495, 15
        %s497 = scalar_select %p496, %s495, 15
        %s498 = smul.addr %s497, 2
        %s499 = smul.addr %s498, 8
        %s500 = scalar_lea.vmem %s2, %s499
        %s501 = smul.u32 8, %s30
        %s502 = smul.u32 8, %s30
        %p503 = scmp.lt.s32.totalorder %s502, 15
        %s504 = scalar_select %p503, %s502, 15
        %s505 = smul.addr %s504, 2
        %s506 = smul.addr %s505, 8
        %s507 = scalar_lea.vmem %s3, %s506
        %s508 = smul.u32 8, %s30
        %p509 = scmp.lt.s32.totalorder %s30, 1
        %s510 = scalar_select %p509, %s30, 1
        %s511 = smul.addr %s510, 8
        %s512 = scalar_lea.vmem %s12, %s511
        %v513 = vld [vmem:[%s486] sm:$0xf]
        %v514 = vld [vmem:[%s486 + $0x4] sm:$0xf]
        %v515 = vld [vmem:[%s486 + $0x8] sm:$0xf]
        %v516 = vld [vmem:[%s486 + $0xc] sm:$0xf]
        %v517 = vld [vmem:[%s486 + $0x10] sm:$0xf]
        %v518 = vld [vmem:[%s486 + $0x14] sm:$0xf]
        %v519 = vld [vmem:[%s486 + $0x18] sm:$0xf]
        %v520 = vld [vmem:[%s486 + $0x1c] sm:$0xf]
        %v521 = vld [vmem:[%s486 + $0x20] sm:$0xf]
        %v522 = vld [vmem:[%s486 + $0x24] sm:$0xf]
        %v523 = vld [vmem:[%s486 + $0x28] sm:$0xf]
        %v524 = vld [vmem:[%s486 + $0x2c] sm:$0xf]
        %v525 = vld [vmem:[%s486 + $0x30] sm:$0xf]
        %v526 = vld [vmem:[%s486 + $0x34] sm:$0xf]
        %v527 = vld [vmem:[%s486 + $0x38] sm:$0xf]
        %v528 = vld [vmem:[%s486 + $0x3c] sm:$0xf]
        %v529 = vld [vmem:[%s500] sm:$0xff]
        %v530 = vld [vmem:[%s500 + $0x8] sm:$0xff]
        %v531 = vld [vmem:[%s500 + $0x10] sm:$0xff]
        %v532 = vld [vmem:[%s500 + $0x18] sm:$0xff]
        %v533 = vld [vmem:[%s500 + $0x20] sm:$0xff]
        %v534 = vld [vmem:[%s500 + $0x28] sm:$0xff]
        %v535 = vld [vmem:[%s500 + $0x30] sm:$0xff]
        %v536 = vld [vmem:[%s500 + $0x38] sm:$0xff]
        %v537 = vld [vmem:[%s500 + $0x40] sm:$0xff]
        %v538 = vld [vmem:[%s500 + $0x48] sm:$0xff]
        %v539 = vld [vmem:[%s500 + $0x50] sm:$0xff]
        %v540 = vld [vmem:[%s500 + $0x58] sm:$0xff]
        %v541 = vld [vmem:[%s500 + $0x60] sm:$0xff]
        %v542 = vld [vmem:[%s500 + $0x68] sm:$0xff]
        %v543 = vld [vmem:[%s500 + $0x70] sm:$0xff]
        %v544 = vld [vmem:[%s500 + $0x78] sm:$0xff]
        %v545 = vunpack.c.l.bf16 %v513
        %v546 = vunpack.c.l.bf16 %v514
        %v547 = vunpack.c.l.bf16 %v515
        %v548 = vunpack.c.l.bf16 %v516
        %v549 = vunpack.c.l.bf16 %v517
        %v550 = vunpack.c.l.bf16 %v518
        %v551 = vunpack.c.l.bf16 %v519
        %v552 = vunpack.c.l.bf16 %v520
        %v553 = vunpack.c.l.bf16 %v521
        %v554 = vunpack.c.l.bf16 %v522
        %v555 = vunpack.c.l.bf16 %v523
        %v556 = vunpack.c.l.bf16 %v524
        %v557 = vunpack.c.l.bf16 %v525
        %v558 = vunpack.c.l.bf16 %v526
        %v559 = vunpack.c.l.bf16 %v527
        %v560 = vunpack.c.l.bf16 %v528
        %562 = vset.pattern.permute.xlu0 0
        %563 = vperm.xlu0 %562, %v529
        %v564 = vpop.permute.xlu0 %563
        %567 = vset.pattern.permute.xlu0 0
        %568 = vperm.xlu0 %567, %v530
        %v569 = vpop.permute.xlu0 %568
        %572 = vset.pattern.permute.xlu0 0
        %573 = vperm.xlu0 %572, %v531
        %v574 = vpop.permute.xlu0 %573
        %577 = vset.pattern.permute.xlu0 0
        %578 = vperm.xlu0 %577, %v532
        %v579 = vpop.permute.xlu0 %578
        %582 = vset.pattern.permute.xlu0 0
        %583 = vperm.xlu0 %582, %v533
        %v584 = vpop.permute.xlu0 %583
        %587 = vset.pattern.permute.xlu0 0
        %588 = vperm.xlu0 %587, %v534
        %v589 = vpop.permute.xlu0 %588
        %592 = vset.pattern.permute.xlu0 0
        %593 = vperm.xlu0 %592, %v535
        %v594 = vpop.permute.xlu0 %593
        %597 = vset.pattern.permute.xlu0 0
        %598 = vperm.xlu0 %597, %v536
        %v599 = vpop.permute.xlu0 %598
        %602 = vset.pattern.permute.xlu0 0
        %603 = vperm.xlu0 %602, %v537
        %v604 = vpop.permute.xlu0 %603
        %607 = vset.pattern.permute.xlu0 0
        %608 = vperm.xlu0 %607, %v538
        %v609 = vpop.permute.xlu0 %608
        %612 = vset.pattern.permute.xlu0 0
        %613 = vperm.xlu0 %612, %v539
        %v614 = vpop.permute.xlu0 %613
        %617 = vset.pattern.permute.xlu0 0
        %618 = vperm.xlu0 %617, %v540
        %v619 = vpop.permute.xlu0 %618
        %622 = vset.pattern.permute.xlu0 0
        %623 = vperm.xlu0 %622, %v541
        %v624 = vpop.permute.xlu0 %623
        %627 = vset.pattern.permute.xlu0 0
        %628 = vperm.xlu0 %627, %v542
        %v629 = vpop.permute.xlu0 %628
        %632 = vset.pattern.permute.xlu0 0
        %633 = vperm.xlu0 %632, %v543
        %v634 = vpop.permute.xlu0 %633
        %637 = vset.pattern.permute.xlu0 0
        %638 = vperm.xlu0 %637, %v544
        %v639 = vpop.permute.xlu0 %638
        %v641 = vmul.f32 %v545, %v564
        %v642 = vmul.f32 %v546, %v569
        %v643 = vmul.f32 %v547, %v574
        %v644 = vmul.f32 %v548, %v579
        %v645 = vmul.f32 %v549, %v584
        %v646 = vmul.f32 %v550, %v589
        %v647 = vmul.f32 %v551, %v594
        %v648 = vmul.f32 %v552, %v599
        %v649 = vmul.f32 %v553, %v604
        %v650 = vmul.f32 %v554, %v609
        %v651 = vmul.f32 %v555, %v614
        %v652 = vmul.f32 %v556, %v619
        %v653 = vmul.f32 %v557, %v624
        %v654 = vmul.f32 %v558, %v629
        %v655 = vmul.f32 %v559, %v634
        %v656 = vmul.f32 %v560, %v639
        %v657 = vadd.f32 %v641, %v642
        %v658 = vrot.slane %v657, 4
        %v659 = vadd.f32 %v657, %v658
        %v660 = vrot.slane %v659, 2
        %v661 = vadd.f32 %v659, %v660
        %v662 = vrot.slane %v661, 1
        %v663 = vadd.f32 %v661, %v662
        %v664 = vadd.f32 %v643, %v644
        %v665 = vrot.slane %v664, 4
        %v666 = vadd.f32 %v664, %v665
        %v667 = vrot.slane %v666, 2
        %v668 = vadd.f32 %v666, %v667
        %v669 = vrot.slane %v668, 1
        %v670 = vadd.f32 %v668, %v669
        %v671 = vadd.f32 %v645, %v646
        %v672 = vrot.slane %v671, 4
        %v673 = vadd.f32 %v671, %v672
        %v674 = vrot.slane %v673, 2
        %v675 = vadd.f32 %v673, %v674
        %v676 = vrot.slane %v675, 1
        %v677 = vadd.f32 %v675, %v676
        %v678 = vadd.f32 %v647, %v648
        %v679 = vrot.slane %v678, 4
        %v680 = vadd.f32 %v678, %v679
        %v681 = vrot.slane %v680, 2
        %v682 = vadd.f32 %v680, %v681
        %v683 = vrot.slane %v682, 1
        %v684 = vadd.f32 %v682, %v683
        %v685 = vadd.f32 %v649, %v650
        %v686 = vrot.slane %v685, 4
        %v687 = vadd.f32 %v685, %v686
        %v688 = vrot.slane %v687, 2
        %v689 = vadd.f32 %v687, %v688
        %v690 = vrot.slane %v689, 1
        %v691 = vadd.f32 %v689, %v690
        %v692 = vadd.f32 %v651, %v652
        %v693 = vrot.slane %v692, 4
        %v694 = vadd.f32 %v692, %v693
        %v695 = vrot.slane %v694, 2
        %v696 = vadd.f32 %v694, %v695
        %v697 = vrot.slane %v696, 1
        %v698 = vadd.f32 %v696, %v697
        %v699 = vadd.f32 %v653, %v654
        %v700 = vrot.slane %v699, 4
        %v701 = vadd.f32 %v699, %v700
        %v702 = vrot.slane %v701, 2
        %v703 = vadd.f32 %v701, %v702
        %v704 = vrot.slane %v703, 1
        %v705 = vadd.f32 %v703, %v704
        %v706 = vadd.f32 %v655, %v656
        %v707 = vrot.slane %v706, 4
        %v708 = vadd.f32 %v706, %v707
        %v709 = vrot.slane %v708, 2
        %v710 = vadd.f32 %v708, %v709
        %v711 = vrot.slane %v710, 1
        %v712 = vadd.f32 %v710, %v711
        %v713 = vld [vmem:[%s493] sm:$0xf]
        %v714 = vld [vmem:[%s493 + $0x4] sm:$0xf]
        %v715 = vld [vmem:[%s493 + $0x8] sm:$0xf]
        %v716 = vld [vmem:[%s493 + $0xc] sm:$0xf]
        %v717 = vld [vmem:[%s493 + $0x10] sm:$0xf]
        %v718 = vld [vmem:[%s493 + $0x14] sm:$0xf]
        %v719 = vld [vmem:[%s493 + $0x18] sm:$0xf]
        %v720 = vld [vmem:[%s493 + $0x1c] sm:$0xf]
        %v721 = vld [vmem:[%s493 + $0x20] sm:$0xf]
        %v722 = vld [vmem:[%s493 + $0x24] sm:$0xf]
        %v723 = vld [vmem:[%s493 + $0x28] sm:$0xf]
        %v724 = vld [vmem:[%s493 + $0x2c] sm:$0xf]
        %v725 = vld [vmem:[%s493 + $0x30] sm:$0xf]
        %v726 = vld [vmem:[%s493 + $0x34] sm:$0xf]
        %v727 = vld [vmem:[%s493 + $0x38] sm:$0xf]
        %v728 = vld [vmem:[%s493 + $0x3c] sm:$0xf]
        %v729 = vld [vmem:[%s507] sm:$0xff]
        %v730 = vld [vmem:[%s507 + $0x8] sm:$0xff]
        %v731 = vld [vmem:[%s507 + $0x10] sm:$0xff]
        %v732 = vld [vmem:[%s507 + $0x18] sm:$0xff]
        %v733 = vld [vmem:[%s507 + $0x20] sm:$0xff]
        %v734 = vld [vmem:[%s507 + $0x28] sm:$0xff]
        %v735 = vld [vmem:[%s507 + $0x30] sm:$0xff]
        %v736 = vld [vmem:[%s507 + $0x38] sm:$0xff]
        %v737 = vld [vmem:[%s507 + $0x40] sm:$0xff]
        %v738 = vld [vmem:[%s507 + $0x48] sm:$0xff]
        %v739 = vld [vmem:[%s507 + $0x50] sm:$0xff]
        %v740 = vld [vmem:[%s507 + $0x58] sm:$0xff]
        %v741 = vld [vmem:[%s507 + $0x60] sm:$0xff]
        %v742 = vld [vmem:[%s507 + $0x68] sm:$0xff]
        %v743 = vld [vmem:[%s507 + $0x70] sm:$0xff]
        %v744 = vld [vmem:[%s507 + $0x78] sm:$0xff]
        %v745 = vunpack.c.l.bf16 %v713
        %v746 = vunpack.c.l.bf16 %v714
        %v747 = vunpack.c.l.bf16 %v715
        %v748 = vunpack.c.l.bf16 %v716
        %v749 = vunpack.c.l.bf16 %v717
        %v750 = vunpack.c.l.bf16 %v718
        %v751 = vunpack.c.l.bf16 %v719
        %v752 = vunpack.c.l.bf16 %v720
        %v753 = vunpack.c.l.bf16 %v721
        %v754 = vunpack.c.l.bf16 %v722
        %v755 = vunpack.c.l.bf16 %v723
        %v756 = vunpack.c.l.bf16 %v724
        %v757 = vunpack.c.l.bf16 %v725
        %v758 = vunpack.c.l.bf16 %v726
        %v759 = vunpack.c.l.bf16 %v727
        %v760 = vunpack.c.l.bf16 %v728
        %762 = vset.pattern.permute.xlu0 0
        %763 = vperm.xlu0 %762, %v729
        %v764 = vpop.permute.xlu0 %763
        %767 = vset.pattern.permute.xlu0 0
        %768 = vperm.xlu0 %767, %v730
        %v769 = vpop.permute.xlu0 %768
        %772 = vset.pattern.permute.xlu0 0
        %773 = vperm.xlu0 %772, %v731
        %v774 = vpop.permute.xlu0 %773
        %777 = vset.pattern.permute.xlu0 0
        %778 = vperm.xlu0 %777, %v732
        %v779 = vpop.permute.xlu0 %778
        %782 = vset.pattern.permute.xlu0 0
        %783 = vperm.xlu0 %782, %v733
        %v784 = vpop.permute.xlu0 %783
        %787 = vset.pattern.permute.xlu0 0
        %788 = vperm.xlu0 %787, %v734
        %v789 = vpop.permute.xlu0 %788
        %792 = vset.pattern.permute.xlu0 0
        %793 = vperm.xlu0 %792, %v735
        %v794 = vpop.permute.xlu0 %793
        %797 = vset.pattern.permute.xlu0 0
        %798 = vperm.xlu0 %797, %v736
        %v799 = vpop.permute.xlu0 %798
        %802 = vset.pattern.permute.xlu0 0
        %803 = vperm.xlu0 %802, %v737
        %v804 = vpop.permute.xlu0 %803
        %807 = vset.pattern.permute.xlu0 0
        %808 = vperm.xlu0 %807, %v738
        %v809 = vpop.permute.xlu0 %808
        %812 = vset.pattern.permute.xlu0 0
        %813 = vperm.xlu0 %812, %v739
        %v814 = vpop.permute.xlu0 %813
        %817 = vset.pattern.permute.xlu0 0
        %818 = vperm.xlu0 %817, %v740
        %v819 = vpop.permute.xlu0 %818
        %822 = vset.pattern.permute.xlu0 0
        %823 = vperm.xlu0 %822, %v741
        %v824 = vpop.permute.xlu0 %823
        %827 = vset.pattern.permute.xlu0 0
        %828 = vperm.xlu0 %827, %v742
        %v829 = vpop.permute.xlu0 %828
        %832 = vset.pattern.permute.xlu0 0
        %833 = vperm.xlu0 %832, %v743
        %v834 = vpop.permute.xlu0 %833
        %837 = vset.pattern.permute.xlu0 0
        %838 = vperm.xlu0 %837, %v744
        %v839 = vpop.permute.xlu0 %838
        %v841 = vmul.f32 %v745, %v764
        %v842 = vmul.f32 %v746, %v769
        %v843 = vmul.f32 %v747, %v774
        %v844 = vmul.f32 %v748, %v779
        %v845 = vmul.f32 %v749, %v784
        %v846 = vmul.f32 %v750, %v789
        %v847 = vmul.f32 %v751, %v794
        %v848 = vmul.f32 %v752, %v799
        %v849 = vmul.f32 %v753, %v804
        %v850 = vmul.f32 %v754, %v809
        %v851 = vmul.f32 %v755, %v814
        %v852 = vmul.f32 %v756, %v819
        %v853 = vmul.f32 %v757, %v824
        %v854 = vmul.f32 %v758, %v829
        %v855 = vmul.f32 %v759, %v834
        %v856 = vmul.f32 %v760, %v839
        %v857 = vadd.f32 %v841, %v842
        %v858 = vrot.slane %v857, 4
        %v859 = vadd.f32 %v857, %v858
        %v860 = vrot.slane %v859, 2
        %v861 = vadd.f32 %v859, %v860
        %v862 = vrot.slane %v861, 1
        %v863 = vadd.f32 %v861, %v862
        %v864 = vadd.f32 %v843, %v844
        %v865 = vrot.slane %v864, 4
        %v866 = vadd.f32 %v864, %v865
        %v867 = vrot.slane %v866, 2
        %v868 = vadd.f32 %v866, %v867
        %v869 = vrot.slane %v868, 1
        %v870 = vadd.f32 %v868, %v869
        %v871 = vadd.f32 %v845, %v846
        %v872 = vrot.slane %v871, 4
        %v873 = vadd.f32 %v871, %v872
        %v874 = vrot.slane %v873, 2
        %v875 = vadd.f32 %v873, %v874
        %v876 = vrot.slane %v875, 1
        %v877 = vadd.f32 %v875, %v876
        %v878 = vadd.f32 %v847, %v848
        %v879 = vrot.slane %v878, 4
        %v880 = vadd.f32 %v878, %v879
        %v881 = vrot.slane %v880, 2
        %v882 = vadd.f32 %v880, %v881
        %v883 = vrot.slane %v882, 1
        %v884 = vadd.f32 %v882, %v883
        %v885 = vadd.f32 %v849, %v850
        %v886 = vrot.slane %v885, 4
        %v887 = vadd.f32 %v885, %v886
        %v888 = vrot.slane %v887, 2
        %v889 = vadd.f32 %v887, %v888
        %v890 = vrot.slane %v889, 1
        %v891 = vadd.f32 %v889, %v890
        %v892 = vadd.f32 %v851, %v852
        %v893 = vrot.slane %v892, 4
        %v894 = vadd.f32 %v892, %v893
        %v895 = vrot.slane %v894, 2
        %v896 = vadd.f32 %v894, %v895
        %v897 = vrot.slane %v896, 1
        %v898 = vadd.f32 %v896, %v897
        %v899 = vadd.f32 %v853, %v854
        %v900 = vrot.slane %v899, 4
        %v901 = vadd.f32 %v899, %v900
        %v902 = vrot.slane %v901, 2
        %v903 = vadd.f32 %v901, %v902
        %v904 = vrot.slane %v903, 1
        %v905 = vadd.f32 %v903, %v904
        %v906 = vadd.f32 %v855, %v856
        %v907 = vrot.slane %v906, 4
        %v908 = vadd.f32 %v906, %v907
        %v909 = vrot.slane %v908, 2
        %v910 = vadd.f32 %v908, %v909
        %v911 = vrot.slane %v910, 1
        %v912 = vadd.f32 %v910, %v911
        %v913 = vld [vmem:[%s4] sm:$0xff]
        %v914 = vld [vmem:[%s4 + $0x8] sm:$0xff]
        %v915 = vld [vmem:[%s4 + $0x10] sm:$0xff]
        %v916 = vld [vmem:[%s4 + $0x18] sm:$0xff]
        %v917 = vld [vmem:[%s4 + $0x20] sm:$0xff]
        %v918 = vld [vmem:[%s4 + $0x28] sm:$0xff]
        %v919 = vld [vmem:[%s4 + $0x30] sm:$0xff]
        %v920 = vld [vmem:[%s4 + $0x38] sm:$0xff]
        %v921 = vld [vmem:[%s4 + $0x40] sm:$0xff]
        %v922 = vld [vmem:[%s4 + $0x48] sm:$0xff]
        %v923 = vld [vmem:[%s4 + $0x50] sm:$0xff]
        %v924 = vld [vmem:[%s4 + $0x58] sm:$0xff]
        %v925 = vld [vmem:[%s4 + $0x60] sm:$0xff]
        %v926 = vld [vmem:[%s4 + $0x68] sm:$0xff]
        %v927 = vld [vmem:[%s4 + $0x70] sm:$0xff]
        %v928 = vld [vmem:[%s4 + $0x78] sm:$0xff]
        %v929 = vld [vmem:[%s5] sm:$0x1]
        %v931 = vlaneseq
        %v932 = vshrl.u32 %v931, 7
        %v933 = vsub.s32 0, %v932
        %v934 = vrot.slane %v929, %v933
        %vm944 = vcmask 1041409
        %v945 = vsel %vm944, %v670, %v663
        %vm946 = vcmask 1042434
        %v947 = vsel %vm946, %v677, %v945
        %vm948 = vcmask 1043459
        %v949 = vsel %vm948, %v684, %v947
        %vm950 = vcmask 1044484
        %v951 = vsel %vm950, %v691, %v949
        %vm952 = vcmask 1045509
        %v953 = vsel %vm952, %v698, %v951
        %vm954 = vcmask 1046534
        %v955 = vsel %vm954, %v705, %v953
        %vm956 = vcmask 1047559
        %v957 = vsel %vm956, %v712, %v955
        %959 = vmatprep.subr.mxu0 0.0
        %960 = vmatpush1.msra.mxu0 %v913
        %961 = vmatprep.subr.mxu0 0.0
        %962 = vmatpush1.msra.mxu0 %v914
        %963 = vmatprep.subr.mxu0 0.0
        %964 = vmatpush1.msra.mxu0 %v915
        %965 = vmatprep.subr.mxu0 0.0
        %966 = vmatpush1.msra.mxu0 %v916
        %967 = vmatprep.subr.mxu0 0.0
        %968 = vmatpush1.msra.mxu0 %v917
        %969 = vmatprep.subr.mxu0 0.0
        %970 = vmatpush1.msra.mxu0 %v918
        %971 = vmatprep.subr.mxu0 0.0
        %972 = vmatpush1.msra.mxu0 %v919
        %973 = vmatprep.subr.mxu0 0.0
        %974 = vmatpush1.msra.mxu0 %v920
        %975 = vmatprep.subr.mxu0 0.0
        %976 = vmatpush1.msra.mxu0 %v921
        %977 = vmatprep.subr.mxu0 0.0
        %978 = vmatpush1.msra.mxu0 %v922
        %979 = vmatprep.subr.mxu0 0.0
        %980 = vmatpush1.msra.mxu0 %v923
        %981 = vmatprep.subr.mxu0 0.0
        %982 = vmatpush1.msra.mxu0 %v924
        %983 = vmatprep.subr.mxu0 0.0
        %984 = vmatpush1.msra.mxu0 %v925
        %985 = vmatprep.subr.mxu0 0.0
        %986 = vmatpush1.msra.mxu0 %v926
        %987 = vmatprep.subr.mxu0 0.0
        %988 = vmatpush1.msra.mxu0 %v927
        %989 = vmatprep.subr.mxu0 0.0
        %990 = vmatpush1.msra.mxu0 %v928
        %991 = vmatprep.subr.mxu0 0.0
        %992 = vmatpush1.msra.mxu0 0.0
        %993 = vmatprep.subr.mxu0 0.0
        %994 = vmatpush1.msra.mxu0 0.0
        %995 = vmatprep.subr.mxu0 0.0
        %996 = vmatpush1.msra.mxu0 0.0
        %997 = vmatprep.subr.mxu0 0.0
        %998 = vmatpush1.msra.mxu0 0.0
        %999 = vmatprep.subr.mxu0 0.0
        %1000 = vmatpush1.msra.mxu0 0.0
        %1001 = vmatprep.subr.mxu0 0.0
        %1002 = vmatpush1.msra.mxu0 0.0
        %1003 = vmatprep.subr.mxu0 0.0
        %1004 = vmatpush1.msra.mxu0 0.0
        %1005 = vmatprep.subr.mxu0 0.0
        %1006 = vmatpush1.msra.mxu0 0.0
        %1007 = vmatprep.subr.mxu0 0.0
        %1008 = vmatpush1.msra.mxu0 0.0
        %1009 = vmatprep.subr.mxu0 0.0
        %1010 = vmatpush1.msra.mxu0 0.0
        %1011 = vmatprep.subr.mxu0 0.0
        %1012 = vmatpush1.msra.mxu0 0.0
        %1013 = vmatprep.subr.mxu0 0.0
        %1014 = vmatpush1.msra.mxu0 0.0
        %1015 = vmatprep.subr.mxu0 0.0
        %1016 = vmatpush1.msra.mxu0 0.0
        %1017 = vmatprep.subr.mxu0 0.0
        %1018 = vmatpush1.msra.mxu0 0.0
        %1019 = vmatprep.subr.mxu0 0.0
        %1020 = vmatpush1.msra.mxu0 0.0
        %1021 = vmatprep.subr.mxu0 0.0
        %1022 = vmatpush1.msra.mxu0 0.0
        %1023 = vmatprep.mubr.f32.mxu0 0.0
        %1024 = vmatmul.mubr.f32.gmra.mrb[0].mxu0 %v957
        %v1025 = vpop.f32.mrb[0].mxu0
        %v1026 = vadd.f32 %v934, %v1025
        %v1027 = vpop.f32.mrb[0].mxu0
        %1028 = vdwg.mxu0
        %v1037 = vsel %vm944, %v870, %v863
        %v1038 = vsel %vm946, %v877, %v1037
        %v1039 = vsel %vm948, %v884, %v1038
        %v1040 = vsel %vm950, %v891, %v1039
        %v1041 = vsel %vm952, %v898, %v1040
        %v1042 = vsel %vm954, %v905, %v1041
        %v1043 = vsel %vm956, %v912, %v1042
        %1045 = vmatprep.subr.mxu0 0.0
        %1046 = vmatpush1.msra.mxu0 %v913
        %1047 = vmatprep.subr.mxu0 0.0
        %1048 = vmatpush1.msra.mxu0 %v914
        %1049 = vmatprep.subr.mxu0 0.0
        %1050 = vmatpush1.msra.mxu0 %v915
        %1051 = vmatprep.subr.mxu0 0.0
        %1052 = vmatpush1.msra.mxu0 %v916
        %1053 = vmatprep.subr.mxu0 0.0
        %1054 = vmatpush1.msra.mxu0 %v917
        %1055 = vmatprep.subr.mxu0 0.0
        %1056 = vmatpush1.msra.mxu0 %v918
        %1057 = vmatprep.subr.mxu0 0.0
        %1058 = vmatpush1.msra.mxu0 %v919
        %1059 = vmatprep.subr.mxu0 0.0
        %1060 = vmatpush1.msra.mxu0 %v920
        %1061 = vmatprep.subr.mxu0 0.0
        %1062 = vmatpush1.msra.mxu0 %v921
        %1063 = vmatprep.subr.mxu0 0.0
        %1064 = vmatpush1.msra.mxu0 %v922
        %1065 = vmatprep.subr.mxu0 0.0
        %1066 = vmatpush1.msra.mxu0 %v923
        %1067 = vmatprep.subr.mxu0 0.0
        %1068 = vmatpush1.msra.mxu0 %v924
        %1069 = vmatprep.subr.mxu0 0.0
        %1070 = vmatpush1.msra.mxu0 %v925
        %1071 = vmatprep.subr.mxu0 0.0
        %1072 = vmatpush1.msra.mxu0 %v926
        %1073 = vmatprep.subr.mxu0 0.0
        %1074 = vmatpush1.msra.mxu0 %v927
        %1075 = vmatprep.subr.mxu0 0.0
        %1076 = vmatpush1.msra.mxu0 %v928
        %1077 = vmatprep.subr.mxu0 0.0
        %1078 = vmatpush1.msra.mxu0 0.0
        %1079 = vmatprep.subr.mxu0 0.0
        %1080 = vmatpush1.msra.mxu0 0.0
        %1081 = vmatprep.subr.mxu0 0.0
        %1082 = vmatpush1.msra.mxu0 0.0
        %1083 = vmatprep.subr.mxu0 0.0
        %1084 = vmatpush1.msra.mxu0 0.0
        %1085 = vmatprep.subr.mxu0 0.0
        %1086 = vmatpush1.msra.mxu0 0.0
        %1087 = vmatprep.subr.mxu0 0.0
        %1088 = vmatpush1.msra.mxu0 0.0
        %1089 = vmatprep.subr.mxu0 0.0
        %1090 = vmatpush1.msra.mxu0 0.0
        %1091 = vmatprep.subr.mxu0 0.0
        %1092 = vmatpush1.msra.mxu0 0.0
        %1093 = vmatprep.subr.mxu0 0.0
        %1094 = vmatpush1.msra.mxu0 0.0
        %1095 = vmatprep.subr.mxu0 0.0
        %1096 = vmatpush1.msra.mxu0 0.0
        %1097 = vmatprep.subr.mxu0 0.0
        %1098 = vmatpush1.msra.mxu0 0.0
        %1099 = vmatprep.subr.mxu0 0.0
        %1100 = vmatpush1.msra.mxu0 0.0
        %1101 = vmatprep.subr.mxu0 0.0
        %1102 = vmatpush1.msra.mxu0 0.0
        %1103 = vmatprep.subr.mxu0 0.0
        %1104 = vmatpush1.msra.mxu0 0.0
        %1105 = vmatprep.subr.mxu0 0.0
        %1106 = vmatpush1.msra.mxu0 0.0
        %1107 = vmatprep.subr.mxu0 0.0
        %1108 = vmatpush1.msra.mxu0 0.0
        %1109 = vmatprep.mubr.f32.mxu0 0.0
        %1110 = vmatmul.mubr.f32.gmra.mrb[0].mxu0 %v1043
        %v1111 = vpop.f32.mrb[0].mxu0
        %v1112 = vadd.f32 %v934, %v1111
        %v1113 = vpop.f32.mrb[0].mxu0
        %1114 = vdwg.mxu0
        %1115 = vst [vmem:[%s467] sm:$0xff] %v1026
        %1116 = vst [vmem:[%s474] sm:$0xff] %v1112
        %v1117 = vsub.f32 %v1026, %v1112
        %v1118 = vand.u32 2147483647, %v1117
        %v1119 = vld [vmem:[%s6] sm:$0xff]
        %v1120 = vld [vmem:[%s6 + $0x8] sm:$0xff]
        %v1121 = vld [vmem:[%s6 + $0x10] sm:$0xff]
        %v1122 = vld [vmem:[%s6 + $0x18] sm:$0xff]
        %v1123 = vld [vmem:[%s6 + $0x20] sm:$0xff]
        %v1124 = vld [vmem:[%s6 + $0x28] sm:$0xff]
        %v1125 = vld [vmem:[%s6 + $0x30] sm:$0xff]
        %v1126 = vld [vmem:[%s6 + $0x38] sm:$0xff]
        %v1127 = vld [vmem:[%s6 + $0x40] sm:$0xff]
        %v1128 = vld [vmem:[%s6 + $0x48] sm:$0xff]
        %v1129 = vld [vmem:[%s6 + $0x50] sm:$0xff]
        %v1130 = vld [vmem:[%s6 + $0x58] sm:$0xff]
        %v1131 = vld [vmem:[%s6 + $0x60] sm:$0xff]
        %v1132 = vld [vmem:[%s6 + $0x68] sm:$0xff]
        %v1133 = vld [vmem:[%s6 + $0x70] sm:$0xff]
        %v1134 = vld [vmem:[%s6 + $0x78] sm:$0xff]
        %v1135 = vld [vmem:[%s7] sm:$0xff]
        %v1136 = vld [vmem:[%s7 + $0x8] sm:$0xff]
        %v1137 = vld [vmem:[%s7 + $0x10] sm:$0xff]
        %v1138 = vld [vmem:[%s7 + $0x18] sm:$0xff]
        %v1139 = vld [vmem:[%s7 + $0x20] sm:$0xff]
        %v1140 = vld [vmem:[%s7 + $0x28] sm:$0xff]
        %v1141 = vld [vmem:[%s7 + $0x30] sm:$0xff]
        %v1142 = vld [vmem:[%s7 + $0x38] sm:$0xff]
        %v1143 = vld [vmem:[%s7 + $0x40] sm:$0xff]
        %v1144 = vld [vmem:[%s7 + $0x48] sm:$0xff]
        %v1145 = vld [vmem:[%s7 + $0x50] sm:$0xff]
        %v1146 = vld [vmem:[%s7 + $0x58] sm:$0xff]
        %v1147 = vld [vmem:[%s7 + $0x60] sm:$0xff]
        %v1148 = vld [vmem:[%s7 + $0x68] sm:$0xff]
        %v1149 = vld [vmem:[%s7 + $0x70] sm:$0xff]
        %v1150 = vld [vmem:[%s7 + $0x78] sm:$0xff]
        %1151 = vmatprep.subr.mxu0 0.0
        %1152 = vmatpush1.msra.mxu0 %v1135
        %1153 = vmatprep.subr.mxu0 0.0
        %1154 = vmatpush1.msra.mxu0 %v1136
        %1155 = vmatprep.subr.mxu0 0.0
        %1156 = vmatpush1.msra.mxu0 %v1137
        %1157 = vmatprep.subr.mxu0 0.0
        %1158 = vmatpush1.msra.mxu0 %v1138
        %1159 = vmatprep.subr.mxu0 0.0
        %1160 = vmatpush1.msra.mxu0 %v1139
        %1161 = vmatprep.subr.mxu0 0.0
        %1162 = vmatpush1.msra.mxu0 %v1140
        %1163 = vmatprep.subr.mxu0 0.0
        %1164 = vmatpush1.msra.mxu0 %v1141
        %1165 = vmatprep.subr.mxu0 0.0
        %1166 = vmatpush1.msra.mxu0 %v1142
        %1167 = vmatprep.subr.mxu0 0.0
        %1168 = vmatpush1.msra.mxu0 %v1143
        %1169 = vmatprep.subr.mxu0 0.0
        %1170 = vmatpush1.msra.mxu0 %v1144
        %1171 = vmatprep.subr.mxu0 0.0
        %1172 = vmatpush1.msra.mxu0 %v1145
        %1173 = vmatprep.subr.mxu0 0.0
        %1174 = vmatpush1.msra.mxu0 %v1146
        %1175 = vmatprep.subr.mxu0 0.0
        %1176 = vmatpush1.msra.mxu0 %v1147
        %1177 = vmatprep.subr.mxu0 0.0
        %1178 = vmatpush1.msra.mxu0 %v1148
        %1179 = vmatprep.subr.mxu0 0.0
        %1180 = vmatpush1.msra.mxu0 %v1149
        %1181 = vmatprep.subr.mxu0 0.0
        %1182 = vmatpush1.msra.mxu0 %v1150
        %1183 = vmatprep.subr.mxu0 0.0
        %1184 = vmatpush1.msra.mxu0 0.0
        %1185 = vmatprep.subr.mxu0 0.0
        %1186 = vmatpush1.msra.mxu0 0.0
        %1187 = vmatprep.subr.mxu0 0.0
        %1188 = vmatpush1.msra.mxu0 0.0
        %1189 = vmatprep.subr.mxu0 0.0
        %1190 = vmatpush1.msra.mxu0 0.0
        %1191 = vmatprep.subr.mxu0 0.0
        %1192 = vmatpush1.msra.mxu0 0.0
        %1193 = vmatprep.subr.mxu0 0.0
        %1194 = vmatpush1.msra.mxu0 0.0
        %1195 = vmatprep.subr.mxu0 0.0
        %1196 = vmatpush1.msra.mxu0 0.0
        %1197 = vmatprep.subr.mxu0 0.0
        %1198 = vmatpush1.msra.mxu0 0.0
        %1199 = vmatprep.subr.mxu0 0.0
        %1200 = vmatpush1.msra.mxu0 0.0
        %1201 = vmatprep.subr.mxu0 0.0
        %1202 = vmatpush1.msra.mxu0 0.0
        %1203 = vmatprep.subr.mxu0 0.0
        %1204 = vmatpush1.msra.mxu0 0.0
        %1205 = vmatprep.subr.mxu0 0.0
        %1206 = vmatpush1.msra.mxu0 0.0
        %1207 = vmatprep.subr.mxu0 0.0
        %1208 = vmatpush1.msra.mxu0 0.0
        %1209 = vmatprep.subr.mxu0 0.0
        %1210 = vmatpush1.msra.mxu0 0.0
        %1211 = vmatprep.subr.mxu0 0.0
        %1212 = vmatpush1.msra.mxu0 0.0
        %1213 = vmatprep.subr.mxu0 0.0
        %1214 = vmatpush1.msra.mxu0 0.0
        %1215 = vmatprep.mubr.f32.mxu0 0.0
        %1216 = vmatmul.mubr.f32.gmra.mrb[0].mxu0 %v1112
        %v1217 = vpop.f32.mrb[0].mxu0
        %v1218 = vadd.f32 0.0, %v1217
        %v1219 = vpop.f32.mrb[0].mxu0
        %1220 = vdwg.mxu0
        %1221 = vmatprep.subr.mxu0 0.0
        %1222 = vmatpush1.msra.mxu0 %v1119
        %1223 = vmatprep.subr.mxu0 0.0
        %1224 = vmatpush1.msra.mxu0 %v1120
        %1225 = vmatprep.subr.mxu0 0.0
        %1226 = vmatpush1.msra.mxu0 %v1121
        %1227 = vmatprep.subr.mxu0 0.0
        %1228 = vmatpush1.msra.mxu0 %v1122
        %1229 = vmatprep.subr.mxu0 0.0
        %1230 = vmatpush1.msra.mxu0 %v1123
        %1231 = vmatprep.subr.mxu0 0.0
        %1232 = vmatpush1.msra.mxu0 %v1124
        %1233 = vmatprep.subr.mxu0 0.0
        %1234 = vmatpush1.msra.mxu0 %v1125
        %1235 = vmatprep.subr.mxu0 0.0
        %1236 = vmatpush1.msra.mxu0 %v1126
        %1237 = vmatprep.subr.mxu0 0.0
        %1238 = vmatpush1.msra.mxu0 %v1127
        %1239 = vmatprep.subr.mxu0 0.0
        %1240 = vmatpush1.msra.mxu0 %v1128
        %1241 = vmatprep.subr.mxu0 0.0
        %1242 = vmatpush1.msra.mxu0 %v1129
        %1243 = vmatprep.subr.mxu0 0.0
        %1244 = vmatpush1.msra.mxu0 %v1130
        %1245 = vmatprep.subr.mxu0 0.0
        %1246 = vmatpush1.msra.mxu0 %v1131
        %1247 = vmatprep.subr.mxu0 0.0
        %1248 = vmatpush1.msra.mxu0 %v1132
        %1249 = vmatprep.subr.mxu0 0.0
        %1250 = vmatpush1.msra.mxu0 %v1133
        %1251 = vmatprep.subr.mxu0 0.0
        %1252 = vmatpush1.msra.mxu0 %v1134
        %1253 = vmatprep.subr.mxu0 0.0
        %1254 = vmatpush1.msra.mxu0 0.0
        %1255 = vmatprep.subr.mxu0 0.0
        %1256 = vmatpush1.msra.mxu0 0.0
        %1257 = vmatprep.subr.mxu0 0.0
        %1258 = vmatpush1.msra.mxu0 0.0
        %1259 = vmatprep.subr.mxu0 0.0
        %1260 = vmatpush1.msra.mxu0 0.0
        %1261 = vmatprep.subr.mxu0 0.0
        %1262 = vmatpush1.msra.mxu0 0.0
        %1263 = vmatprep.subr.mxu0 0.0
        %1264 = vmatpush1.msra.mxu0 0.0
        %1265 = vmatprep.subr.mxu0 0.0
        %1266 = vmatpush1.msra.mxu0 0.0
        %1267 = vmatprep.subr.mxu0 0.0
        %1268 = vmatpush1.msra.mxu0 0.0
        %1269 = vmatprep.subr.mxu0 0.0
        %1270 = vmatpush1.msra.mxu0 0.0
        %1271 = vmatprep.subr.mxu0 0.0
        %1272 = vmatpush1.msra.mxu0 0.0
        %1273 = vmatprep.subr.mxu0 0.0
        %1274 = vmatpush1.msra.mxu0 0.0
        %1275 = vmatprep.subr.mxu0 0.0
        %1276 = vmatpush1.msra.mxu0 0.0
        %1277 = vmatprep.subr.mxu0 0.0
        %1278 = vmatpush1.msra.mxu0 0.0
        %1279 = vmatprep.subr.mxu0 0.0
        %1280 = vmatpush1.msra.mxu0 0.0
        %1281 = vmatprep.subr.mxu0 0.0
        %1282 = vmatpush1.msra.mxu0 0.0
        %1283 = vmatprep.subr.mxu0 0.0
        %1284 = vmatpush1.msra.mxu0 0.0
        %1285 = vmatprep.mubr.f32.mxu0 0.0
        %1286 = vmatmul.mubr.f32.gmra.mrb[0].mxu0 %v1026
        %v1287 = vpop.f32.mrb[0].mxu0
        %v1288 = vadd.f32 %v1218, %v1287
        %v1289 = vpop.f32.mrb[0].mxu0
        %1290 = vdwg.mxu0
        %v1291 = vld [vmem:[%s8] sm:$0xff]
        %v1292 = vld [vmem:[%s8 + $0x8] sm:$0xff]
        %v1293 = vld [vmem:[%s8 + $0x10] sm:$0xff]
        %v1294 = vld [vmem:[%s8 + $0x18] sm:$0xff]
        %v1295 = vld [vmem:[%s8 + $0x20] sm:$0xff]
        %v1296 = vld [vmem:[%s8 + $0x28] sm:$0xff]
        %v1297 = vld [vmem:[%s8 + $0x30] sm:$0xff]
        %v1298 = vld [vmem:[%s8 + $0x38] sm:$0xff]
        %v1299 = vld [vmem:[%s8 + $0x40] sm:$0xff]
        %v1300 = vld [vmem:[%s8 + $0x48] sm:$0xff]
        %v1301 = vld [vmem:[%s8 + $0x50] sm:$0xff]
        %v1302 = vld [vmem:[%s8 + $0x58] sm:$0xff]
        %v1303 = vld [vmem:[%s8 + $0x60] sm:$0xff]
        %v1304 = vld [vmem:[%s8 + $0x68] sm:$0xff]
        %v1305 = vld [vmem:[%s8 + $0x70] sm:$0xff]
        %v1306 = vld [vmem:[%s8 + $0x78] sm:$0xff]
        %1307 = vmatprep.subr.mxu0 0.0
        %1308 = vmatpush1.msra.mxu0 %v1291
        %1309 = vmatprep.subr.mxu0 0.0
        %1310 = vmatpush1.msra.mxu0 %v1292
        %1311 = vmatprep.subr.mxu0 0.0
        %1312 = vmatpush1.msra.mxu0 %v1293
        %1313 = vmatprep.subr.mxu0 0.0
        %1314 = vmatpush1.msra.mxu0 %v1294
        %1315 = vmatprep.subr.mxu0 0.0
        %1316 = vmatpush1.msra.mxu0 %v1295
        %1317 = vmatprep.subr.mxu0 0.0
        %1318 = vmatpush1.msra.mxu0 %v1296
        %1319 = vmatprep.subr.mxu0 0.0
        %1320 = vmatpush1.msra.mxu0 %v1297
        %1321 = vmatprep.subr.mxu0 0.0
        %1322 = vmatpush1.msra.mxu0 %v1298
        %1323 = vmatprep.subr.mxu0 0.0
        %1324 = vmatpush1.msra.mxu0 %v1299
        %1325 = vmatprep.subr.mxu0 0.0
        %1326 = vmatpush1.msra.mxu0 %v1300
        %1327 = vmatprep.subr.mxu0 0.0
        %1328 = vmatpush1.msra.mxu0 %v1301
        %1329 = vmatprep.subr.mxu0 0.0
        %1330 = vmatpush1.msra.mxu0 %v1302
        %1331 = vmatprep.subr.mxu0 0.0
        %1332 = vmatpush1.msra.mxu0 %v1303
        %1333 = vmatprep.subr.mxu0 0.0
        %1334 = vmatpush1.msra.mxu0 %v1304
        %1335 = vmatprep.subr.mxu0 0.0
        %1336 = vmatpush1.msra.mxu0 %v1305
        %1337 = vmatprep.subr.mxu0 0.0
        %1338 = vmatpush1.msra.mxu0 %v1306
        %1339 = vmatprep.subr.mxu0 0.0
        %1340 = vmatpush1.msra.mxu0 0.0
        %1341 = vmatprep.subr.mxu0 0.0
        %1342 = vmatpush1.msra.mxu0 0.0
        %1343 = vmatprep.subr.mxu0 0.0
        %1344 = vmatpush1.msra.mxu0 0.0
        %1345 = vmatprep.subr.mxu0 0.0
        %1346 = vmatpush1.msra.mxu0 0.0
        %1347 = vmatprep.subr.mxu0 0.0
        %1348 = vmatpush1.msra.mxu0 0.0
        %1349 = vmatprep.subr.mxu0 0.0
        %1350 = vmatpush1.msra.mxu0 0.0
        %1351 = vmatprep.subr.mxu0 0.0
        %1352 = vmatpush1.msra.mxu0 0.0
        %1353 = vmatprep.subr.mxu0 0.0
        %1354 = vmatpush1.msra.mxu0 0.0
        %1355 = vmatprep.subr.mxu0 0.0
        %1356 = vmatpush1.msra.mxu0 0.0
        %1357 = vmatprep.subr.mxu0 0.0
        %1358 = vmatpush1.msra.mxu0 0.0
        %1359 = vmatprep.subr.mxu0 0.0
        %1360 = vmatpush1.msra.mxu0 0.0
        %1361 = vmatprep.subr.mxu0 0.0
        %1362 = vmatpush1.msra.mxu0 0.0
        %1363 = vmatprep.subr.mxu0 0.0
        %1364 = vmatpush1.msra.mxu0 0.0
        %1365 = vmatprep.subr.mxu0 0.0
        %1366 = vmatpush1.msra.mxu0 0.0
        %1367 = vmatprep.subr.mxu0 0.0
        %1368 = vmatpush1.msra.mxu0 0.0
        %1369 = vmatprep.subr.mxu0 0.0
        %1370 = vmatpush1.msra.mxu0 0.0
        %1371 = vmatprep.mubr.f32.mxu0 0.0
        %1372 = vmatmul.mubr.f32.gmra.mrb[0].mxu0 %v1118
        %v1373 = vpop.f32.mrb[0].mxu0
        %v1374 = vadd.f32 0.0, %v1373
        %v1375 = vpop.f32.mrb[0].mxu0
        %1376 = vdwg.mxu0
        %v1377 = vadd.f32 %v1288, %v1374
        %v1378 = vld [vmem:[%s9] sm:$0x1]
        %v1380 = vlaneseq
        %v1381 = vshrl.u32 %v1380, 7
        %v1382 = vsub.s32 0, %v1381
        %v1383 = vrot.slane %v1378, %v1382
        %v1385 = vadd.f32 %v1377, %v1383
        %1386 = vst [vmem:[%s512] sm:$0xff] %v1385
        %s1387 = sand.u32 %s268, 1
        %s1388 = scalar_lea.sflag [#allocation3], %s1387
        %s1389 = sand.u32 %s268, 1
        %s1390 = smul.addr %s1389, 8
        %s1391 = scalar_lea.vmem [#allocation2], %s1390
        %s1392 = sand.u32 %s294, 1
        %s1393 = scalar_lea.sflag [#allocation5], %s1392
        %s1394 = sand.u32 %s294, 1
        %s1395 = smul.addr %s1394, 8
        %s1396 = scalar_lea.vmem [#allocation4], %s1395
        %p1397 = scmp.lt.s32.totalorder %s30, 1
        %s1398 = scalar_select %p1397, %s30, 1
        %s1399 = smul.addr %s1398, 8
        %s1400 = scalar_lea.vmem %s12, %s1399
        // Predicated region
        $region61: #{sentence_bert_forward.1} parent=59 // pred_check
          %p1401 = pneg %p278
        $region62: #{sentence_bert_forward.1} parent=59 // pred_check_branch
          %1403 = sbr.rel (%p1401) target = $region64
        $region63: #{sentence_bert_forward.1} parent=59 // pred_region
          %s1405 = ssub.s32 128, 128
          %1406 = vsyncadd %s1388, %s1405
          %s1407 = smul.addr %s30, 128
          %s1408 = scalar_lea.hbm %s10, %s1407
          %s1410 = sshll.u32 %s1391, 4
          %s1411 = int_to_ptr.vmem [resolvable:$true] %s1410
          %1413 = dma.vmem_to_hbm [thread:$0]  %s1411, 128, %s1408, %s1388
        $region64: #{sentence_bert_forward.1} parent=59 // pred_fallthru
          _
        // Predicated region
        $region65: #{sentence_bert_forward.1} parent=59 // pred_check
          %p1414 = pneg %p304
        $region66: #{sentence_bert_forward.1} parent=59 // pred_check_branch
          %1416 = sbr.rel (%p1414) target = $region68
        $region67: #{sentence_bert_forward.1} parent=59 // pred_region
          %s1418 = ssub.s32 128, 128
          %1419 = vsyncadd %s1393, %s1418
          %s1420 = smul.addr %s30, 128
          %s1421 = scalar_lea.hbm %s11, %s1420
          %s1423 = sshll.u32 %s1396, 4
          %s1424 = int_to_ptr.vmem [resolvable:$true] %s1423
          %1426 = dma.vmem_to_hbm [thread:$0]  %s1424, 128, %s1421, %s1393
        $region68: #{sentence_bert_forward.1} parent=59 // pred_fallthru
          _
        // Predicated region
        $region69: #{sentence_bert_forward.1} parent=59 // pred_check
          %p1427 = pneg %p330
        $region70: #{sentence_bert_forward.1} parent=59 // pred_check_branch
          %1429 = sbr.rel (%p1427) target = $region72
        $region71: #{sentence_bert_forward.1} parent=59 // pred_region
          _
        $region72: #{sentence_bert_forward.1} parent=59 // pred_fallthru
          _
      $region60: #{sentence_bert_forward.1} parent=5 // pred_fallthru
        _
      %p1430 = scmp.le.s32.totalorder 2, %s25
      // Predicated region
      $region73: #{sentence_bert_forward.1} parent=5 // pred_check
        %p1431 = pneg %p1430
      $region74: #{sentence_bert_forward.1} parent=5 // pred_check_branch
        %1433 = sbr.rel (%p1431) target = $region76
      $region75: #{sentence_bert_forward.1} parent=5 // pred_region
        %s1434 = ssub.s32 %s25, 2
        // Predicated region
        $region77: #{sentence_bert_forward.1} parent=75 // pred_check
          %p1435 = pneg %p284
        $region78: #{sentence_bert_forward.1} parent=75 // pred_check_branch
          %1437 = sbr.rel (%p1435) target = $region80
        $region79: #{sentence_bert_forward.1} parent=75 // pred_region
          %s1438 = sand.u32 %s269, 1
          %s1439 = scalar_lea.sflag [#allocation3], %s1438
          %s1440 = sand.u32 %s269, 1
          %s1441 = smul.addr %s1440, 8
          %s1442 = scalar_lea.vmem [#allocation2], %s1441
          %1443 = dma.done %s1439, 128
        $region80: #{sentence_bert_forward.1} parent=75 // pred_fallthru
          _
        // Predicated region
        $region81: #{sentence_bert_forward.1} parent=75 // pred_check
          %p1444 = pneg %p310
        $region82: #{sentence_bert_forward.1} parent=75 // pred_check_branch
          %1446 = sbr.rel (%p1444) target = $region84
        $region83: #{sentence_bert_forward.1} parent=75 // pred_region
          %s1447 = sand.u32 %s295, 1
          %s1448 = scalar_lea.sflag [#allocation5], %s1447
          %s1449 = sand.u32 %s295, 1
          %s1450 = smul.addr %s1449, 8
          %s1451 = scalar_lea.vmem [#allocation4], %s1450
          %1452 = dma.done %s1448, 128
        $region84: #{sentence_bert_forward.1} parent=75 // pred_fallthru
          _
        // Predicated region
        $region85: #{sentence_bert_forward.1} parent=75 // pred_check
          %p1453 = pneg %p336
        $region86: #{sentence_bert_forward.1} parent=75 // pred_check_branch
          %1455 = sbr.rel (%p1453) target = $region88
        $region87: #{sentence_bert_forward.1} parent=75 // pred_region
          %p1456 = scmp.lt.s32.totalorder %s31, 1
          %s1457 = scalar_select %p1456, %s31, 1
          %s1458 = smul.addr %s1457, 8
          %s1459 = scalar_lea.vmem %s12, %s1458
        $region88: #{sentence_bert_forward.1} parent=75 // pred_fallthru
          _
      $region76: #{sentence_bert_forward.1} parent=5 // pred_fallthru
        _
    $region6: #{sentence_bert_forward.1} parent=1 // loop_footer
      %s29 = sadd.s32 1, %s25
    $region7: #{sentence_bert_forward.1} parent=1 // loop_footer_branch
      %24 = sbr.rel target = $region3
    $region8: #{sentence_bert_forward.1} parent=1 // loop_exit
      _
    %1460 = vsyncpa [#allocation3], 1
    %s1461 = scalar_lea.sflag [#allocation3], 1
    %1462 = vsyncpa %s1461, 1
    %1463 = vsyncpa [#allocation5], 1
    %s1464 = scalar_lea.sflag [#allocation5], 1
    %1465 = vsyncpa %s1464, 1

</llo_original>
